<compile_context>
chip_gen: v7x
topology: tpu7x:2x2x1
jax: 0.10.0
libtpu: 0.0.40
codegen_flags: <defaults>
</compile_context>

<pallas_src>
import functools

import jax
import jax.numpy as jnp
from jax.experimental import pallas as pl
from jax.experimental.pallas import tpu as pltpu

BN_EPS = 1e-5            # torch.nn.BatchNorm1d default eps
NEG_SLOPE = 0.01         # torch.nn.LeakyReLU default negative_slope
MAX_TILE_ROWS = 1024     # chained path: rows per grid step (multiple of 16)
VMEM_LIMIT = 48 * 1024 * 1024   # <= v7x physical 64 MiB, fine on v5e/v6e

# Fused-path residency estimate: x + two largest consecutive activations +
# output, all f32, with slack for compiler temporaries; weights ~0.4 MiB bf16.
_FUSED_BYTES_PER_ROW = 4 * 2048
_FUSED_FIXED_BYTES = 2 * 1024 * 1024


def _round_up(n, m):
    return ((n + m - 1) // m) * m


def _vmem_capacity_bytes():
    """Generation-aware VMEM capacity (v7x=64MiB, v5e/v6e=128MiB); safe fallback."""
    try:
        cap = getattr(pltpu.get_tpu_info(), "vmem_capacity_bytes", None)
        if cap:
            return int(cap)
    except Exception:
        pass
    return 64 * 1024 * 1024  # conservative (v7x)


def _fused_row_budget():
    budget = min(VMEM_LIMIT, int(0.45 * _vmem_capacity_bytes()))
    return max(0, (budget - _FUSED_FIXED_BYTES) // _FUSED_BYTES_PER_ROW)


# ---------------------------------------------------------------------------
# FUSED PATH: the whole forward in a single pallas_call (batch fits VMEM).
# ---------------------------------------------------------------------------
def _fused_encoder_kernel(*refs, rows, n_layers):
    """refs = (x, [gamma, beta, w_bf16, bias] * n_layers, out)."""
    x_ref = refs[0]
    out_ref = refs[-1]
    prm = refs[1:-1]
    assert len(prm) == 4 * n_layers

    b_pad = x_ref.shape[0]
    inv_rows = 1.0 / float(rows)
    need_mask = rows != b_pad
    if need_mask:
        row_ids = jax.lax.broadcasted_iota(jnp.int32, (b_pad, 1), 0)
        valid = row_ids < rows

    h = x_ref[...].astype(jnp.float32)
    for k in range(n_layers):
        gamma = prm[4 * k][...]         # (1, c_in)
        beta = prm[4 * k + 1][...]      # (1, c_in)
        w = prm[4 * k + 2][...]         # (c_in, c_out) bf16
        bias = prm[4 * k + 3][...]      # (1, c_out)

        # Training-mode BatchNorm: batch stats in f32, padded rows masked out.
        hm = jnp.where(valid, h, 0.0) if need_mask else h
        mean = jnp.sum(hm, axis=0, keepdims=True) * inv_rows
        ex2 = jnp.sum(hm * hm, axis=0, keepdims=True) * inv_rows
        var = jnp.maximum(ex2 - mean * mean, 0.0)
        scale = gamma * jax.lax.rsqrt(var + BN_EPS)
        shift = beta - mean * scale
        hbn = h * scale + shift

        y = jnp.dot(hbn.astype(jnp.bfloat16), w,
                    preferred_element_type=jnp.float32) + bias
        if k < n_layers - 1:
            y = jnp.where(y >= 0, y, NEG_SLOPE * y)
        h = y

    out_ref[...] = h


def _forward_fused(x, params):
    rows, in_feat = x.shape
    pdims = params["pdims"]
    n_layers = len(pdims) - 1
    b_pad = _round_up(max(rows, 8), 8)

    xp = jnp.zeros((b_pad, pdims[0]), jnp.float32)
    xp = xp.at[:rows, :in_feat].set(x.astype(jnp.float32))

    ins = [xp]
    for k in range(n_layers):
        ins += [params["bn_gamma"][k], params["bn_beta"][k],
                params["w_bf16"][k], params["b"][k]]

    flops = 2 * b_pad * sum(pdims[k] * pdims[k + 1] for k in range(n_layers))
    bytes_acc = 4 * b_pad * (pdims[0] + pdims[-1]) + sum(
        2 * pdims[k] * pdims[k + 1] + 12 * pdims[k] + 4 * pdims[k + 1]
        for k in range(n_layers))

    out = pl.pallas_call(
        functools.partial(_fused_encoder_kernel, rows=rows, n_layers=n_layers),
        out_shape=jax.ShapeDtypeStruct((b_pad, pdims[-1]), jnp.float32),
        in_specs=[pl.BlockSpec(memory_space=pltpu.MemorySpace.VMEM)] * len(ins),
        out_specs=pl.BlockSpec(memory_space=pltpu.MemorySpace.VMEM),
        compiler_params=pltpu.CompilerParams(vmem_limit_bytes=VMEM_LIMIT),
        cost_estimate=pl.CostEstimate(
            flops=flops,
            transcendentals=sum(pdims[k] for k in range(n_layers)),
            bytes_accessed=bytes_acc),
    )(*ins)
    return out[:rows]


# ---------------------------------------------------------------------------
# CHAINED PATH (large batches): row-tiled, BN folded into weights, bf16 acts.
# ---------------------------------------------------------------------------
def _chained_layer_kernel(z_ref, w_ref, b_ref, out_ref, *stats_refs,
                          rows, tile_rows, apply_lrelu, collect_stats):
    # Folded-BN Linear: z (bf16) @ W' (bf16) -> f32 accumulate, then LeakyReLU.
    y = jnp.dot(z_ref[...], w_ref[...],
                preferred_element_type=jnp.float32) + b_ref[...]
    if apply_lrelu:
        y = jnp.where(y >= 0, y, NEG_SLOPE * y)
    out_ref[...] = y.astype(out_ref.dtype)     # bf16 store for intermediates

    if collect_stats:
        i = pl.program_id(0)

        def _write(v):
            stats_refs[0][...] = jnp.sum(v, axis=0, keepdims=True)[None]
            stats_refs[1][...] = jnp.sum(v * v, axis=0, keepdims=True)[None]

        if rows % tile_rows != 0:
            # Batch-padding rows exist only in the last tile; gate the mask.
            last = pl.num_programs(0) - 1

            @pl.when(i != last)
            def _():
                _write(y)

            @pl.when(i == last)
            def _():
                row_ids = (jax.lax.broadcasted_iota(jnp.int32, (tile_rows, 1), 0)
                           + i * tile_rows)
                _write(jnp.where(row_ids < rows, y, 0.0))
        else:
            _write(y)


def _chained_layer(z, w_fold, b_fold, *, rows, tile_rows, apply_lrelu,
                   collect_stats, out_dtype):
    n_pad, c_in = z.shape
    c_out = w_fold.shape[1]
    num_tiles = n_pad // tile_rows

    kernel = functools.partial(
        _chained_layer_kernel, rows=rows, tile_rows=tile_rows,
        apply_lrelu=apply_lrelu, collect_stats=collect_stats)

    act_shape = jax.ShapeDtypeStruct((n_pad, c_out), out_dtype)
    act_spec = pl.BlockSpec((tile_rows, c_out), lambda i: (i, 0))
    in_specs = [
        pl.BlockSpec((tile_rows, c_in), lambda i: (i, 0)),   # activation tile
        pl.BlockSpec((c_in, c_out), lambda i: (0, 0)),       # folded weight bf16
        pl.BlockSpec((1, c_out), lambda i: (0, 0)),          # folded bias f32
    ]
    if collect_stats:
        stat_shape = jax.ShapeDtypeStruct((num_tiles, 1, c_out), jnp.float32)
        stat_spec = pl.BlockSpec((1, 1, c_out), lambda i: (i, 0, 0))
        out_shape = (act_shape, stat_shape, stat_shape)
        out_specs = (act_spec, stat_spec, stat_spec)
    else:
        out_shape = act_shape
        out_specs = act_spec

    cost = pl.CostEstimate(
        flops=2 * n_pad * c_in * c_out, transcendentals=0,
        bytes_accessed=(int(z.dtype.itemsize) * n_pad * c_in
                        + int(jnp.dtype(out_dtype).itemsize) * n_pad * c_out
                        + 2 * c_in * c_out + 4 * c_out
                        + (8 * num_tiles * c_out if collect_stats else 0)))

    return pl.pallas_call(
        kernel, out_shape=out_shape, grid=(num_tiles,),
        in_specs=in_specs, out_specs=out_specs,
        compiler_params=pltpu.CompilerParams(
            dimension_semantics=("parallel",),
            vmem_limit_bytes=VMEM_LIMIT),
        cost_estimate=cost,
    )(z, w_fold, b_fold)


def _forward_chained(x, params):
    rows, in_feat = x.shape
    dims, pdims = params["dims"], params["pdims"]
    n_layers = len(dims) - 1

    tile_rows = min(MAX_TILE_ROWS, _round_up(rows, 16))  # mult. of 16 (bf16)
    n_pad = _round_up(rows, tile_rows)

    # Lane-dense bf16 input (100 -> 128 features, batch -> tile multiple).
    xp = jnp.zeros((n_pad, pdims[0]), jnp.bfloat16)
    xp = xp.at[:rows, :in_feat].set(x.astype(jnp.bfloat16))

    # BN0 statistics of the tiny raw f32 input: plain jnp, no dedicated kernel.
    mean0 = jnp.mean(x, axis=0)
    var0 = jnp.maximum(jnp.mean(x * x, axis=0) - mean0 * mean0, 0.0)
    gamma0 = params["bn_gamma"][0][0, :in_feat]
    beta0 = params["bn_beta"][0][0, :in_feat]
    scale_v = gamma0 * jax.lax.rsqrt(var0 + BN_EPS)
    shift_v = beta0 - mean0 * scale_v
    # Padded feature columns: scale=1 / shift=0 (irrelevant: zero weight rows).
    scale = jnp.ones((pdims[0],), jnp.float32).at[:in_feat].set(scale_v)
    shift = jnp.zeros((pdims[0],), jnp.float32).at[:in_feat].set(shift_v)

    z = xp
    for k in range(n_layers):
        last = k == n_layers - 1
        w_f32 = params["w"][k]
        # Fold training-mode BN into the Linear (tiny JAX op between calls).
        w_fold = (scale[:, None] * w_f32).astype(jnp.bfloat16)
        b_fold = params["b"][k] + shift[None, :] @ w_f32

        res = _chained_layer(
            z, w_fold, b_fold, rows=rows, tile_rows=tile_rows,
            apply_lrelu=not last, collect_stats=not last,
            out_dtype=jnp.float32 if last else jnp.bfloat16)

        if last:
            z = res
        else:
            z, sums, sumsqs = res
            gamma = params["bn_gamma"][k + 1][0]
            beta = params["bn_beta"][k + 1][0]
            mean = jnp.sum(sums, axis=(0, 1)) / rows
            ex2 = jnp.sum(sumsqs, axis=(0, 1)) / rows
            var = jnp.maximum(ex2 - mean * mean, 0.0)
            scale = gamma * jax.lax.rsqrt(var + BN_EPS)
            shift = beta - mean * scale
    return z[:rows]


# ---------------------------------------------------------------------------
# Top-level forward: ConvEncoder(convolutional=False)
# ---------------------------------------------------------------------------
def conv_encoder(x, params, force_chained=False):
    """x: (B, 100) float32 -> (B, h_size) float32."""
    rows, in_feat = x.shape
    assert in_feat == params["dims"][0]
    if (not force_chained) and _round_up(max(rows, 8), 8) <= _fused_row_budget():
        return _forward_fused(x, params)
    return _forward_chained(x, params)


# ---------------------------------------------------------------------------
# Deterministic parameter init (PyTorch-default-like), zero-padded lane-dense.
# ---------------------------------------------------------------------------
def init_params(key, h_size=512):
    dims = [100, 256, 150, 128, h_size]              # logical widths
    pdims = [_round_up(d, 128) for d in dims]        # 128, 256, 256, 128, 512

    ws, ws_bf16, bs, gammas, betas = [], [], [], [], []
    keys = jax.random.split(key, len(dims) - 1)
    for k in range(len(dims) - 1):
        d_in, d_out = dims[k], dims[k + 1]
        p_in, p_out = pdims[k], pdims[k + 1]
        kw, kb = jax.random.split(keys[k])
        bound = 1.0 / (d_in ** 0.5)                  # torch.nn.Linear default init
        w = jax.random.uniform(kw, (d_in, d_out), jnp.float32, -bound, bound)
        b = jax.random.uniform(kb, (d_out,), jnp.float32, -bound, bound)
        w_pad = jnp.zeros((p_in, p_out), jnp.float32).at[:d_in, :d_out].set(w)
        b_pad = jnp.zeros((1, p_out), jnp.float32).at[0, :d_out].set(b)
        ws.append(w_pad)                             # f32: used for BN folding
        ws_bf16.append(w_pad.astype(jnp.bfloat16))   # bf16 MXU operand (fused path)
        bs.append(b_pad)
        # BatchNorm_k normalizes Linear_k's input; torch default affine = (1, 0).
        gammas.append(jnp.ones((1, p_in), jnp.float32))
        betas.append(jnp.zeros((1, p_in), jnp.float32))
    return {"w": ws, "w_bf16": ws_bf16, "b": bs, "bn_gamma": gammas,
            "bn_beta": betas, "dims": dims, "pdims": pdims}


# Pure-JAX f32 reference on unpadded shapes (training-mode BatchNorm).
def conv_encoder_ref(x, params):
    dims = params["dims"]
    h = x.astype(jnp.float32)
    n_layers = len(dims) - 1
    for k in range(n_layers):
        d_in, d_out = dims[k], dims[k + 1]
        gamma = params["bn_gamma"][k][0, :d_in]
        beta = params["bn_beta"][k][0, :d_in]
        w = params["w"][k][:d_in, :d_out]
        b = params["b"][k][0, :d_out]
        mean = jnp.mean(h, axis=0)
        var = jnp.maximum(jnp.mean(h * h, axis=0) - mean * mean, 0.0)
        scale = gamma * jax.lax.rsqrt(var + BN_EPS)
        shift = beta - mean * scale
        h = h * scale + shift                        # BatchNorm1d (train mode)
        h = jnp.dot(h, w, preferred_element_type=jnp.float32) + b
        if k < n_layers - 1:
            h = jnp.where(h >= 0, h, NEG_SLOPE * h)  # LeakyReLU
    return h


if __name__ == "__main__":
    key = jax.random.PRNGKey(0)
    k_param, k_x = jax.random.split(key)

    # BatchNorm1d(100) / Linear(100, 256) imply x: (batch, 100).
    batch, in_features, h_size = 10, 100, 512
    x = jax.random.normal(k_x, (batch, in_features), jnp.float32)
    params = init_params(k_param, h_size=h_size)
    ref = conv_encoder_ref(x, params)

    # Default path: fully-fused single pallas_call (batch fits VMEM).
    out = jax.block_until_ready(conv_encoder(x, params))
    assert out.shape == (batch, h_size), out.shape
    err = float(jnp.max(jnp.abs(out - ref)))
    assert jnp.allclose(out, ref, atol=2e-2, rtol=2e-2), f"fused max abs err {err}"

    # Also exercise the large-batch fallback (row-tiled, folded BN, bf16 acts).
    out2 = jax.block_until_ready(conv_encoder(x, params, force_chained=True))
    assert out2.shape == (batch, h_size), out2.shape
    err2 = float(jnp.max(jnp.abs(out2 - ref)))
    assert jnp.allclose(out2, ref, atol=5e-2, rtol=5e-2), f"chained max abs err {err2}"

    print("KERNEL_OK")
</pallas_src>

<mosaic_0001>
module attributes {stable_mosaic.version = 11 : i64} {
  func.func @_fused_encoder_kernel(%arg0: memref<16x128xf32, #tpu.memory_space<vmem>>, %arg1: memref<1x128xf32, #tpu.memory_space<vmem>>, %arg2: memref<1x128xf32, #tpu.memory_space<vmem>>, %arg3: memref<128x256xbf16, #tpu.memory_space<vmem>>, %arg4: memref<1x256xf32, #tpu.memory_space<vmem>>, %arg5: memref<1x256xf32, #tpu.memory_space<vmem>>, %arg6: memref<1x256xf32, #tpu.memory_space<vmem>>, %arg7: memref<256x256xbf16, #tpu.memory_space<vmem>>, %arg8: memref<1x256xf32, #tpu.memory_space<vmem>>, %arg9: memref<1x256xf32, #tpu.memory_space<vmem>>, %arg10: memref<1x256xf32, #tpu.memory_space<vmem>>, %arg11: memref<256x128xbf16, #tpu.memory_space<vmem>>, %arg12: memref<1x128xf32, #tpu.memory_space<vmem>>, %arg13: memref<1x128xf32, #tpu.memory_space<vmem>>, %arg14: memref<1x128xf32, #tpu.memory_space<vmem>>, %arg15: memref<128x512xbf16, #tpu.memory_space<vmem>>, %arg16: memref<1x512xf32, #tpu.memory_space<vmem>>, %arg17: memref<16x512xf32, #tpu.memory_space<vmem>>) attributes {dimension_semantics = [], scalar_prefetch = 0 : i64, scratch_operands = 0 : i64, tpu.core_type = #tpu.core_type<tc>} {
    %0 = tpu.iota {dimensions = array<i32: 0>} : vector<16x1xi32>
    %c10_i32 = arith.constant 10 : i32
    %1 = vector.broadcast %c10_i32 : i32 to vector<16x1xi32>
    %2 = arith.cmpi slt, %0, %1 : vector<16x1xi32>
    %c0 = arith.constant 0 : index
    %c0_0 = arith.constant 0 : index
    %3 = vector.load %arg0[%c0, %c0_0] : memref<16x128xf32, #tpu.memory_space<vmem>>, vector<16x128xf32>
    %c0_1 = arith.constant 0 : index
    %c0_2 = arith.constant 0 : index
    %4 = vector.load %arg1[%c0_1, %c0_2] : memref<1x128xf32, #tpu.memory_space<vmem>>, vector<1x128xf32>
    %c0_3 = arith.constant 0 : index
    %c0_4 = arith.constant 0 : index
    %5 = vector.load %arg2[%c0_3, %c0_4] : memref<1x128xf32, #tpu.memory_space<vmem>>, vector<1x128xf32>
    %c0_5 = arith.constant 0 : index
    %c0_6 = arith.constant 0 : index
    %6 = vector.load %arg3[%c0_5, %c0_6] : memref<128x256xbf16, #tpu.memory_space<vmem>>, vector<128x256xbf16>
    %c0_7 = arith.constant 0 : index
    %c0_8 = arith.constant 0 : index
    %7 = vector.load %arg4[%c0_7, %c0_8] : memref<1x256xf32, #tpu.memory_space<vmem>>, vector<1x256xf32>
    %cst = arith.constant 0.000000e+00 : f32
    %8 = vector.shape_cast %2 : vector<16x1xi1> to vector<16x1xi1>
    %9 = vector.broadcast %8 : vector<16x1xi1> to vector<16x128xi1>
    %10 = vector.broadcast %cst : f32 to vector<16x128xf32>
    %11 = arith.select %9, %3, %10 : vector<16x128xi1>, vector<16x128xf32>
    %cst_9 = arith.constant dense<0.000000e+00> : vector<128xf32>
    %12 = vector.multi_reduction <add>, %11, %cst_9 [0] : vector<16x128xf32> to vector<128xf32>
    %13 = vector.shape_cast %12 : vector<128xf32> to vector<1x128xf32>
    %cst_10 = arith.constant 1.000000e-01 : f32
    %14 = vector.broadcast %cst_10 : f32 to vector<1x128xf32>
    %15 = arith.mulf %13, %14 : vector<1x128xf32>
    %16 = arith.mulf %11, %11 : vector<16x128xf32>
    %cst_11 = arith.constant dense<0.000000e+00> : vector<128xf32>
    %17 = vector.multi_reduction <add>, %16, %cst_11 [0] : vector<16x128xf32> to vector<128xf32>
    %18 = vector.shape_cast %17 : vector<128xf32> to vector<1x128xf32>
    %cst_12 = arith.constant 1.000000e-01 : f32
    %19 = vector.broadcast %cst_12 : f32 to vector<1x128xf32>
    %20 = arith.mulf %18, %19 : vector<1x128xf32>
    %21 = arith.mulf %15, %15 : vector<1x128xf32>
    %22 = arith.subf %20, %21 : vector<1x128xf32>
    %cst_13 = arith.constant 0.000000e+00 : f32
    %23 = vector.broadcast %cst_13 : f32 to vector<1x128xf32>
    %24 = arith.maximumf %22, %23 : vector<1x128xf32>
    %cst_14 = arith.constant 9.99999974E-6 : f32
    %25 = vector.broadcast %cst_14 : f32 to vector<1x128xf32>
    %26 = arith.addf %24, %25 : vector<1x128xf32>
    %27 = math.rsqrt %26 : vector<1x128xf32>
    %28 = arith.mulf %4, %27 : vector<1x128xf32>
    %29 = arith.mulf %15, %28 : vector<1x128xf32>
    %30 = arith.subf %5, %29 : vector<1x128xf32>
    %31 = vector.broadcast %28 : vector<1x128xf32> to vector<16x128xf32>
    %32 = arith.mulf %3, %31 : vector<16x128xf32>
    %33 = vector.broadcast %30 : vector<1x128xf32> to vector<16x128xf32>
    %34 = arith.addf %32, %33 : vector<16x128xf32>
    %35 = arith.truncf %34 : vector<16x128xf32> to vector<16x128xbf16>
    %cst_15 = arith.constant dense<0.000000e+00> : vector<16x256xf32>
    %36 = tpu.matmul %35, %6, %cst_15 {dimension_numbers = #tpu.dot_dimension_numbers<[1], [0], [0], [1], [0, 0, 1, 1], [], []>} : vector<16x128xbf16>, vector<128x256xbf16>, vector<16x256xf32> -> vector<16x256xf32>
    %37 = vector.broadcast %7 : vector<1x256xf32> to vector<16x256xf32>
    %38 = arith.addf %36, %37 : vector<16x256xf32>
    %cst_16 = arith.constant 0.000000e+00 : f32
    %39 = vector.broadcast %cst_16 : f32 to vector<16x256xf32>
    %40 = arith.cmpf oge, %38, %39 : vector<16x256xf32>
    %cst_17 = arith.constant 0.00999999977 : f32
    %41 = vector.broadcast %cst_17 : f32 to vector<16x256xf32>
    %42 = arith.mulf %41, %38 : vector<16x256xf32>
    %43 = arith.select %40, %38, %42 : vector<16x256xi1>, vector<16x256xf32>
    %c0_18 = arith.constant 0 : index
    %c0_19 = arith.constant 0 : index
    %44 = vector.load %arg5[%c0_18, %c0_19] : memref<1x256xf32, #tpu.memory_space<vmem>>, vector<1x256xf32>
    %c0_20 = arith.constant 0 : index
    %c0_21 = arith.constant 0 : index
    %45 = vector.load %arg6[%c0_20, %c0_21] : memref<1x256xf32, #tpu.memory_space<vmem>>, vector<1x256xf32>
    %c0_22 = arith.constant 0 : index
    %c0_23 = arith.constant 0 : index
    %46 = vector.load %arg7[%c0_22, %c0_23] : memref<256x256xbf16, #tpu.memory_space<vmem>>, vector<256x256xbf16>
    %c0_24 = arith.constant 0 : index
    %c0_25 = arith.constant 0 : index
    %47 = vector.load %arg8[%c0_24, %c0_25] : memref<1x256xf32, #tpu.memory_space<vmem>>, vector<1x256xf32>
    %cst_26 = arith.constant 0.000000e+00 : f32
    %48 = vector.shape_cast %2 : vector<16x1xi1> to vector<16x1xi1>
    %49 = vector.broadcast %48 : vector<16x1xi1> to vector<16x256xi1>
    %50 = vector.broadcast %cst_26 : f32 to vector<16x256xf32>
    %51 = arith.select %49, %43, %50 : vector<16x256xi1>, vector<16x256xf32>
    %cst_27 = arith.constant dense<0.000000e+00> : vector<256xf32>
    %52 = vector.multi_reduction <add>, %51, %cst_27 [0] : vector<16x256xf32> to vector<256xf32>
    %53 = vector.shape_cast %52 : vector<256xf32> to vector<1x256xf32>
    %cst_28 = arith.constant 1.000000e-01 : f32
    %54 = vector.broadcast %cst_28 : f32 to vector<1x256xf32>
    %55 = arith.mulf %53, %54 : vector<1x256xf32>
    %56 = arith.mulf %51, %51 : vector<16x256xf32>
    %cst_29 = arith.constant dense<0.000000e+00> : vector<256xf32>
    %57 = vector.multi_reduction <add>, %56, %cst_29 [0] : vector<16x256xf32> to vector<256xf32>
    %58 = vector.shape_cast %57 : vector<256xf32> to vector<1x256xf32>
    %cst_30 = arith.constant 1.000000e-01 : f32
    %59 = vector.broadcast %cst_30 : f32 to vector<1x256xf32>
    %60 = arith.mulf %58, %59 : vector<1x256xf32>
    %61 = arith.mulf %55, %55 : vector<1x256xf32>
    %62 = arith.subf %60, %61 : vector<1x256xf32>
    %cst_31 = arith.constant 0.000000e+00 : f32
    %63 = vector.broadcast %cst_31 : f32 to vector<1x256xf32>
    %64 = arith.maximumf %62, %63 : vector<1x256xf32>
    %cst_32 = arith.constant 9.99999974E-6 : f32
    %65 = vector.broadcast %cst_32 : f32 to vector<1x256xf32>
    %66 = arith.addf %64, %65 : vector<1x256xf32>
    %67 = math.rsqrt %66 : vector<1x256xf32>
    %68 = arith.mulf %44, %67 : vector<1x256xf32>
    %69 = arith.mulf %55, %68 : vector<1x256xf32>
    %70 = arith.subf %45, %69 : vector<1x256xf32>
    %71 = vector.broadcast %68 : vector<1x256xf32> to vector<16x256xf32>
    %72 = arith.mulf %43, %71 : vector<16x256xf32>
    %73 = vector.broadcast %70 : vector<1x256xf32> to vector<16x256xf32>
    %74 = arith.addf %72, %73 : vector<16x256xf32>
    %75 = arith.truncf %74 : vector<16x256xf32> to vector<16x256xbf16>
    %cst_33 = arith.constant dense<0.000000e+00> : vector<16x256xf32>
    %76 = tpu.matmul %75, %46, %cst_33 {dimension_numbers = #tpu.dot_dimension_numbers<[1], [0], [0], [1], [0, 0, 1, 1], [], []>} : vector<16x256xbf16>, vector<256x256xbf16>, vector<16x256xf32> -> vector<16x256xf32>
    %77 = vector.broadcast %47 : vector<1x256xf32> to vector<16x256xf32>
    %78 = arith.addf %76, %77 : vector<16x256xf32>
    %cst_34 = arith.constant 0.000000e+00 : f32
    %79 = vector.broadcast %cst_34 : f32 to vector<16x256xf32>
    %80 = arith.cmpf oge, %78, %79 : vector<16x256xf32>
    %cst_35 = arith.constant 0.00999999977 : f32
    %81 = vector.broadcast %cst_35 : f32 to vector<16x256xf32>
    %82 = arith.mulf %81, %78 : vector<16x256xf32>
    %83 = arith.select %80, %78, %82 : vector<16x256xi1>, vector<16x256xf32>
    %c0_36 = arith.constant 0 : index
    %c0_37 = arith.constant 0 : index
    %84 = vector.load %arg9[%c0_36, %c0_37] : memref<1x256xf32, #tpu.memory_space<vmem>>, vector<1x256xf32>
    %c0_38 = arith.constant 0 : index
    %c0_39 = arith.constant 0 : index
    %85 = vector.load %arg10[%c0_38, %c0_39] : memref<1x256xf32, #tpu.memory_space<vmem>>, vector<1x256xf32>
    %c0_40 = arith.constant 0 : index
    %c0_41 = arith.constant 0 : index
    %86 = vector.load %arg11[%c0_40, %c0_41] : memref<256x128xbf16, #tpu.memory_space<vmem>>, vector<256x128xbf16>
    %c0_42 = arith.constant 0 : index
    %c0_43 = arith.constant 0 : index
    %87 = vector.load %arg12[%c0_42, %c0_43] : memref<1x128xf32, #tpu.memory_space<vmem>>, vector<1x128xf32>
    %cst_44 = arith.constant 0.000000e+00 : f32
    %88 = vector.shape_cast %2 : vector<16x1xi1> to vector<16x1xi1>
    %89 = vector.broadcast %88 : vector<16x1xi1> to vector<16x256xi1>
    %90 = vector.broadcast %cst_44 : f32 to vector<16x256xf32>
    %91 = arith.select %89, %83, %90 : vector<16x256xi1>, vector<16x256xf32>
    %cst_45 = arith.constant dense<0.000000e+00> : vector<256xf32>
    %92 = vector.multi_reduction <add>, %91, %cst_45 [0] : vector<16x256xf32> to vector<256xf32>
    %93 = vector.shape_cast %92 : vector<256xf32> to vector<1x256xf32>
    %cst_46 = arith.constant 1.000000e-01 : f32
    %94 = vector.broadcast %cst_46 : f32 to vector<1x256xf32>
    %95 = arith.mulf %93, %94 : vector<1x256xf32>
    %96 = arith.mulf %91, %91 : vector<16x256xf32>
    %cst_47 = arith.constant dense<0.000000e+00> : vector<256xf32>
    %97 = vector.multi_reduction <add>, %96, %cst_47 [0] : vector<16x256xf32> to vector<256xf32>
    %98 = vector.shape_cast %97 : vector<256xf32> to vector<1x256xf32>
    %cst_48 = arith.constant 1.000000e-01 : f32
    %99 = vector.broadcast %cst_48 : f32 to vector<1x256xf32>
    %100 = arith.mulf %98, %99 : vector<1x256xf32>
    %101 = arith.mulf %95, %95 : vector<1x256xf32>
    %102 = arith.subf %100, %101 : vector<1x256xf32>
    %cst_49 = arith.constant 0.000000e+00 : f32
    %103 = vector.broadcast %cst_49 : f32 to vector<1x256xf32>
    %104 = arith.maximumf %102, %103 : vector<1x256xf32>
    %cst_50 = arith.constant 9.99999974E-6 : f32
    %105 = vector.broadcast %cst_50 : f32 to vector<1x256xf32>
    %106 = arith.addf %104, %105 : vector<1x256xf32>
    %107 = math.rsqrt %106 : vector<1x256xf32>
    %108 = arith.mulf %84, %107 : vector<1x256xf32>
    %109 = arith.mulf %95, %108 : vector<1x256xf32>
    %110 = arith.subf %85, %109 : vector<1x256xf32>
    %111 = vector.broadcast %108 : vector<1x256xf32> to vector<16x256xf32>
    %112 = arith.mulf %83, %111 : vector<16x256xf32>
    %113 = vector.broadcast %110 : vector<1x256xf32> to vector<16x256xf32>
    %114 = arith.addf %112, %113 : vector<16x256xf32>
    %115 = arith.truncf %114 : vector<16x256xf32> to vector<16x256xbf16>
    %cst_51 = arith.constant dense<0.000000e+00> : vector<16x128xf32>
    %116 = tpu.matmul %115, %86, %cst_51 {dimension_numbers = #tpu.dot_dimension_numbers<[1], [0], [0], [1], [0, 0, 1, 1], [], []>} : vector<16x256xbf16>, vector<256x128xbf16>, vector<16x128xf32> -> vector<16x128xf32>
    %117 = vector.broadcast %87 : vector<1x128xf32> to vector<16x128xf32>
    %118 = arith.addf %116, %117 : vector<16x128xf32>
    %cst_52 = arith.constant 0.000000e+00 : f32
    %119 = vector.broadcast %cst_52 : f32 to vector<16x128xf32>
    %120 = arith.cmpf oge, %118, %119 : vector<16x128xf32>
    %cst_53 = arith.constant 0.00999999977 : f32
    %121 = vector.broadcast %cst_53 : f32 to vector<16x128xf32>
    %122 = arith.mulf %121, %118 : vector<16x128xf32>
    %123 = arith.select %120, %118, %122 : vector<16x128xi1>, vector<16x128xf32>
    %c0_54 = arith.constant 0 : index
    %c0_55 = arith.constant 0 : index
    %124 = vector.load %arg13[%c0_54, %c0_55] : memref<1x128xf32, #tpu.memory_space<vmem>>, vector<1x128xf32>
    %c0_56 = arith.constant 0 : index
    %c0_57 = arith.constant 0 : index
    %125 = vector.load %arg14[%c0_56, %c0_57] : memref<1x128xf32, #tpu.memory_space<vmem>>, vector<1x128xf32>
    %c0_58 = arith.constant 0 : index
    %c0_59 = arith.constant 0 : index
    %126 = vector.load %arg15[%c0_58, %c0_59] : memref<128x512xbf16, #tpu.memory_space<vmem>>, vector<128x512xbf16>
    %c0_60 = arith.constant 0 : index
    %c0_61 = arith.constant 0 : index
    %127 = vector.load %arg16[%c0_60, %c0_61] : memref<1x512xf32, #tpu.memory_space<vmem>>, vector<1x512xf32>
    %cst_62 = arith.constant 0.000000e+00 : f32
    %128 = vector.shape_cast %2 : vector<16x1xi1> to vector<16x1xi1>
    %129 = vector.broadcast %128 : vector<16x1xi1> to vector<16x128xi1>
    %130 = vector.broadcast %cst_62 : f32 to vector<16x128xf32>
    %131 = arith.select %129, %123, %130 : vector<16x128xi1>, vector<16x128xf32>
    %cst_63 = arith.constant dense<0.000000e+00> : vector<128xf32>
    %132 = vector.multi_reduction <add>, %131, %cst_63 [0] : vector<16x128xf32> to vector<128xf32>
    %133 = vector.shape_cast %132 : vector<128xf32> to vector<1x128xf32>
    %cst_64 = arith.constant 1.000000e-01 : f32
    %134 = vector.broadcast %cst_64 : f32 to vector<1x128xf32>
    %135 = arith.mulf %133, %134 : vector<1x128xf32>
    %136 = arith.mulf %131, %131 : vector<16x128xf32>
    %cst_65 = arith.constant dense<0.000000e+00> : vector<128xf32>
    %137 = vector.multi_reduction <add>, %136, %cst_65 [0] : vector<16x128xf32> to vector<128xf32>
    %138 = vector.shape_cast %137 : vector<128xf32> to vector<1x128xf32>
    %cst_66 = arith.constant 1.000000e-01 : f32
    %139 = vector.broadcast %cst_66 : f32 to vector<1x128xf32>
    %140 = arith.mulf %138, %139 : vector<1x128xf32>
    %141 = arith.mulf %135, %135 : vector<1x128xf32>
    %142 = arith.subf %140, %141 : vector<1x128xf32>
    %cst_67 = arith.constant 0.000000e+00 : f32
    %143 = vector.broadcast %cst_67 : f32 to vector<1x128xf32>
    %144 = arith.maximumf %142, %143 : vector<1x128xf32>
    %cst_68 = arith.constant 9.99999974E-6 : f32
    %145 = vector.broadcast %cst_68 : f32 to vector<1x128xf32>
    %146 = arith.addf %144, %145 : vector<1x128xf32>
    %147 = math.rsqrt %146 : vector<1x128xf32>
    %148 = arith.mulf %124, %147 : vector<1x128xf32>
    %149 = arith.mulf %135, %148 : vector<1x128xf32>
    %150 = arith.subf %125, %149 : vector<1x128xf32>
    %151 = vector.broadcast %148 : vector<1x128xf32> to vector<16x128xf32>
    %152 = arith.mulf %123, %151 : vector<16x128xf32>
    %153 = vector.broadcast %150 : vector<1x128xf32> to vector<16x128xf32>
    %154 = arith.addf %152, %153 : vector<16x128xf32>
    %155 = arith.truncf %154 : vector<16x128xf32> to vector<16x128xbf16>
    %cst_69 = arith.constant dense<0.000000e+00> : vector<16x512xf32>
    %156 = tpu.matmul %155, %126, %cst_69 {dimension_numbers = #tpu.dot_dimension_numbers<[1], [0], [0], [1], [0, 0, 1, 1], [], []>} : vector<16x128xbf16>, vector<128x512xbf16>, vector<16x512xf32> -> vector<16x512xf32>
    %157 = vector.broadcast %127 : vector<1x512xf32> to vector<16x512xf32>
    %158 = arith.addf %156, %157 : vector<16x512xf32>
    %c0_70 = arith.constant 0 : index
    %c0_71 = arith.constant 0 : index
    %159 = vector.load %arg17[%c0_70, %c0_71] : memref<16x512xf32, #tpu.memory_space<vmem>>, vector<16x512xf32>
    tpu.vector_store %arg17[%c0_70, %c0_71], %158 {strides = array<i32>} : memref<16x512xf32, #tpu.memory_space<vmem>>, vector<16x512xf32>,
    return
  }
}

</mosaic_0001>

<llo_original>
// kernel: tpu_custom_call.1
$region0: #{tpu_custom_call.1}
  #allocation0 [shape = 'u32[]', space=smem, size = 0x4, offset = 0x4, fixed_abs, tag = 'smem constant byte address 0x4 - core index']
  #allocation1 [shape = 'u32[144,128]{1,0:T(1,128)}', space=vmem, size = 0x12000, scoped, tag = 'internal scratch']
  %s0 = inlined_call_operand.hbm [shape: f32[16,128], index: 0, kind: input, shape index: {}]
  %s1 = inlined_call_operand.vmem [shape: f32[1,128], index: 1, kind: input, shape index: {}]
  %s2 = inlined_call_operand.hbm [shape: f32[1,128], index: 2, kind: input, shape index: {}]
  %s3 = inlined_call_operand.hbm [shape: bf16[128,256], index: 3, kind: input, shape index: {}]
  %s4 = inlined_call_operand.vmem [shape: f32[1,256], index: 4, kind: input, shape index: {}]
  %s5 = inlined_call_operand.vmem [shape: f32[1,256], index: 5, kind: input, shape index: {}]
  %s6 = inlined_call_operand.vmem [shape: f32[1,256], index: 6, kind: input, shape index: {}]
  %s7 = inlined_call_operand.hbm [shape: bf16[256,256], index: 7, kind: input, shape index: {}]
  %s8 = inlined_call_operand.vmem [shape: f32[1,256], index: 8, kind: input, shape index: {}]
  %s9 = inlined_call_operand.vmem [shape: f32[1,256], index: 9, kind: input, shape index: {}]
  %s10 = inlined_call_operand.vmem [shape: f32[1,256], index: 10, kind: input, shape index: {}]
  %s11 = inlined_call_operand.hbm [shape: bf16[256,128], index: 11, kind: input, shape index: {}]
  %s12 = inlined_call_operand.vmem [shape: f32[1,128], index: 12, kind: input, shape index: {}]
  %s13 = inlined_call_operand.vmem [shape: f32[1,128], index: 13, kind: input, shape index: {}]
  %s14 = inlined_call_operand.vmem [shape: f32[1,128], index: 14, kind: input, shape index: {}]
  %s15 = inlined_call_operand.hbm [shape: bf16[128,512], index: 15, kind: input, shape index: {}]
  %s16 = inlined_call_operand.vmem [shape: f32[1,512], index: 16, kind: input, shape index: {}]
  %s17 = inlined_call_operand.hbm [shape: f32[16,512], index: 17, kind: output, shape index: {}]
  %s18 = sld [smem:[#allocation0]]
  $region102: #{tpu_custom_call.1} parent=0
    _
  %s20 = ssub.s32 1, %s18
  %s21 = scalar_select 0, %s20, %s18
  $region1: #{tpu_custom_call.1} parent=0
    #allocation2 [shape = 'u8[8192]{0}', space=vmem, size = 0x2000, scoped, tag = 'input window, operand 0, single buffered']
    #allocation3 [shape = 's32[1]{0}', space=sflag, size = 0x4, scoped, tag = 'scoped memory for tpu_custom_call.1']
    #allocation4 [shape = 's32[1]{0}', space=sflag, size = 0x4, scoped, tag = 'scoped memory for tpu_custom_call.1']
    #allocation5 [shape = 'u8[512]{0}', space=vmem, size = 0x400, scoped, tag = 'input window, operand 2, single buffered']
    #allocation6 [shape = 's32[1]{0}', space=sflag, size = 0x4, scoped, tag = 'scoped memory for tpu_custom_call.1']
    #allocation7 [shape = 'u8[65536]{0}', space=vmem, size = 0x10000, scoped, tag = 'input window, operand 3, single buffered']
    #allocation8 [shape = 'u8[131072]{0}', space=vmem, size = 0x20000, scoped, tag = 'input window, operand 7, single buffered']
    #allocation9 [shape = 's32[1]{0}', space=sflag, size = 0x4, scoped, tag = 'scoped memory for tpu_custom_call.1']
    #allocation10 [shape = 'u8[65536]{0}', space=vmem, size = 0x10000, scoped, tag = 'input window, operand 11, single buffered']
    #allocation11 [shape = 'u8[131072]{0}', space=vmem, size = 0x20000, scoped, tag = 'input window, operand 15, single buffered']
    #allocation12 [shape = 's32[1]{0}', space=sflag, size = 0x4, scoped, tag = 'scoped memory for tpu_custom_call.1']
    #allocation13 [shape = 'u8[32768]{0}', space=vmem, size = 0x8000, scoped, tag = 'output window, operand 0, single buffered']
    %22 = vsyncpa [#allocation3], 0
    %23 = vsyncpa [#allocation6], 0
    %24 = vsyncpa [#allocation9], 0
    %25 = vsyncpa [#allocation12], 0
    %26 = vsyncpa [#allocation4], 0
    // Predicated region
    $region2: #{tpu_custom_call.1} parent=1 // pred_check
      _
    $region3: #{tpu_custom_call.1} parent=1 // pred_check_branch
      %28 = sbr.rel (0) target = $region5
    $region4: #{tpu_custom_call.1} parent=1 // pred_region
      %s30 = ssub.s32 256, 256
      %31 = vsyncadd [#allocation3], %s30
      %s32 = sshll.u32 [#allocation2], 4
      %s33 = int_to_ptr.vmem [resolvable:$true] %s32
      %38 = dma.hbm_to_vmem [thread:$0]  %s0, 256, %s33, [#allocation3], 128, 128, 8
    $region5: #{tpu_custom_call.1} parent=1 // pred_fallthru
      _
    // Predicated region
    $region6: #{tpu_custom_call.1} parent=1 // pred_check
      _
    $region7: #{tpu_custom_call.1} parent=1 // pred_check_branch
      %40 = sbr.rel (0) target = $region9
    $region8: #{tpu_custom_call.1} parent=1 // pred_region
      _
    $region9: #{tpu_custom_call.1} parent=1 // pred_fallthru
      _
    // Predicated region
    $region10: #{tpu_custom_call.1} parent=1 // pred_check
      _
    $region11: #{tpu_custom_call.1} parent=1 // pred_check_branch
      %42 = sbr.rel (0) target = $region13
    $region12: #{tpu_custom_call.1} parent=1 // pred_region
      %s44 = ssub.s32 16, 16
      %45 = vsyncadd [#allocation6], %s44
      %s47 = sshll.u32 [#allocation5], 4
      %s48 = int_to_ptr.vmem [resolvable:$true] %s47
      %50 = dma.hbm_to_vmem [thread:$0]  %s2, 16, %s48, [#allocation6]
    $region13: #{tpu_custom_call.1} parent=1 // pred_fallthru
      _
    // Predicated region
    $region14: #{tpu_custom_call.1} parent=1 // pred_check
      _
    $region15: #{tpu_custom_call.1} parent=1 // pred_check_branch
      %52 = sbr.rel (0) target = $region17
    $region16: #{tpu_custom_call.1} parent=1 // pred_region
      %s54 = ssub.s32 2048, 2048
      %55 = vsyncadd [#allocation6], %s54
      %s56 = sshll.u32 [#allocation7], 4
      %s57 = int_to_ptr.vmem [resolvable:$true] %s56
      %62 = dma.hbm_to_vmem [thread:$0]  %s3, 2048, %s57, [#allocation6], 128, 128, 8
    $region17: #{tpu_custom_call.1} parent=1 // pred_fallthru
      _
    // Predicated region
    $region18: #{tpu_custom_call.1} parent=1 // pred_check
      _
    $region19: #{tpu_custom_call.1} parent=1 // pred_check_branch
      %64 = sbr.rel (0) target = $region21
    $region20: #{tpu_custom_call.1} parent=1 // pred_region
      _
    $region21: #{tpu_custom_call.1} parent=1 // pred_fallthru
      _
    // Predicated region
    $region22: #{tpu_custom_call.1} parent=1 // pred_check
      _
    $region23: #{tpu_custom_call.1} parent=1 // pred_check_branch
      %66 = sbr.rel (0) target = $region25
    $region24: #{tpu_custom_call.1} parent=1 // pred_region
      _
    $region25: #{tpu_custom_call.1} parent=1 // pred_fallthru
      _
    // Predicated region
    $region26: #{tpu_custom_call.1} parent=1 // pred_check
      _
    $region27: #{tpu_custom_call.1} parent=1 // pred_check_branch
      %68 = sbr.rel (0) target = $region29
    $region28: #{tpu_custom_call.1} parent=1 // pred_region
      _
    $region29: #{tpu_custom_call.1} parent=1 // pred_fallthru
      _
    // Predicated region
    $region30: #{tpu_custom_call.1} parent=1 // pred_check
      _
    $region31: #{tpu_custom_call.1} parent=1 // pred_check_branch
      %70 = sbr.rel (0) target = $region33
    $region32: #{tpu_custom_call.1} parent=1 // pred_region
      %s72 = ssub.s32 4096, 4096
      %73 = vsyncadd [#allocation9], %s72
      %s74 = sshll.u32 [#allocation8], 4
      %s75 = int_to_ptr.vmem [resolvable:$true] %s74
      %80 = dma.hbm_to_vmem [thread:$0]  %s7, 4096, %s75, [#allocation9], 128, 128, 8
    $region33: #{tpu_custom_call.1} parent=1 // pred_fallthru
      _
    // Predicated region
    $region34: #{tpu_custom_call.1} parent=1 // pred_check
      _
    $region35: #{tpu_custom_call.1} parent=1 // pred_check_branch
      %82 = sbr.rel (0) target = $region37
    $region36: #{tpu_custom_call.1} parent=1 // pred_region
      _
    $region37: #{tpu_custom_call.1} parent=1 // pred_fallthru
      _
    // Predicated region
    $region38: #{tpu_custom_call.1} parent=1 // pred_check
      _
    $region39: #{tpu_custom_call.1} parent=1 // pred_check_branch
      %84 = sbr.rel (0) target = $region41
    $region40: #{tpu_custom_call.1} parent=1 // pred_region
      _
    $region41: #{tpu_custom_call.1} parent=1 // pred_fallthru
      _
    // Predicated region
    $region42: #{tpu_custom_call.1} parent=1 // pred_check
      _
    $region43: #{tpu_custom_call.1} parent=1 // pred_check_branch
      %86 = sbr.rel (0) target = $region45
    $region44: #{tpu_custom_call.1} parent=1 // pred_region
      _
    $region45: #{tpu_custom_call.1} parent=1 // pred_fallthru
      _
    // Predicated region
    $region46: #{tpu_custom_call.1} parent=1 // pred_check
      _
    $region47: #{tpu_custom_call.1} parent=1 // pred_check_branch
      %88 = sbr.rel (0) target = $region49
    $region48: #{tpu_custom_call.1} parent=1 // pred_region
      %s90 = ssub.s32 2048, 2048
      %91 = vsyncadd [#allocation9], %s90
      %s92 = sshll.u32 [#allocation10], 4
      %s93 = int_to_ptr.vmem [resolvable:$true] %s92
      %98 = dma.hbm_to_vmem [thread:$0]  %s11, 2048, %s93, [#allocation9], 64, 64, 4
    $region49: #{tpu_custom_call.1} parent=1 // pred_fallthru
      _
    // Predicated region
    $region50: #{tpu_custom_call.1} parent=1 // pred_check
      _
    $region51: #{tpu_custom_call.1} parent=1 // pred_check_branch
      %100 = sbr.rel (0) target = $region53
    $region52: #{tpu_custom_call.1} parent=1 // pred_region
      _
    $region53: #{tpu_custom_call.1} parent=1 // pred_fallthru
      _
    // Predicated region
    $region54: #{tpu_custom_call.1} parent=1 // pred_check
      _
    $region55: #{tpu_custom_call.1} parent=1 // pred_check_branch
      %102 = sbr.rel (0) target = $region57
    $region56: #{tpu_custom_call.1} parent=1 // pred_region
      _
    $region57: #{tpu_custom_call.1} parent=1 // pred_fallthru
      _
    // Predicated region
    $region58: #{tpu_custom_call.1} parent=1 // pred_check
      _
    $region59: #{tpu_custom_call.1} parent=1 // pred_check_branch
      %104 = sbr.rel (0) target = $region61
    $region60: #{tpu_custom_call.1} parent=1 // pred_region
      _
    $region61: #{tpu_custom_call.1} parent=1 // pred_fallthru
      _
    // Predicated region
    $region62: #{tpu_custom_call.1} parent=1 // pred_check
      _
    $region63: #{tpu_custom_call.1} parent=1 // pred_check_branch
      %106 = sbr.rel (0) target = $region65
    $region64: #{tpu_custom_call.1} parent=1 // pred_region
      %s108 = ssub.s32 4096, 4096
      %109 = vsyncadd [#allocation12], %s108
      %s110 = sshll.u32 [#allocation11], 4
      %s111 = int_to_ptr.vmem [resolvable:$true] %s110
      %116 = dma.hbm_to_vmem [thread:$0]  %s15, 4096, %s111, [#allocation12], 256, 256, 16
    $region65: #{tpu_custom_call.1} parent=1 // pred_fallthru
      _
    // Predicated region
    $region66: #{tpu_custom_call.1} parent=1 // pred_check
      _
    $region67: #{tpu_custom_call.1} parent=1 // pred_check_branch
      %118 = sbr.rel (0) target = $region69
    $region68: #{tpu_custom_call.1} parent=1 // pred_region
      _
    $region69: #{tpu_custom_call.1} parent=1 // pred_fallthru
      _
    // Predicated region
    $region70: #{tpu_custom_call.1} parent=1 // pred_check
      _
    $region71: #{tpu_custom_call.1} parent=1 // pred_check_branch
      %120 = sbr.rel (0) target = $region73
    $region72: #{tpu_custom_call.1} parent=1 // pred_region
      %121 = dma.done [#allocation3], 256
    $region73: #{tpu_custom_call.1} parent=1 // pred_fallthru
      _
    // Predicated region
    $region74: #{tpu_custom_call.1} parent=1 // pred_check
      _
    $region75: #{tpu_custom_call.1} parent=1 // pred_check_branch
      %123 = sbr.rel (0) target = $region77
    $region76: #{tpu_custom_call.1} parent=1 // pred_region
      %124 = dma.done [#allocation6], 16
    $region77: #{tpu_custom_call.1} parent=1 // pred_fallthru
      _
    // Predicated region
    $region78: #{tpu_custom_call.1} parent=1 // pred_check
      _
    $region79: #{tpu_custom_call.1} parent=1 // pred_check_branch
      %126 = sbr.rel (0) target = $region81
    $region80: #{tpu_custom_call.1} parent=1 // pred_region
      %127 = dma.done [#allocation6], 2048
    $region81: #{tpu_custom_call.1} parent=1 // pred_fallthru
      _
    // Predicated region
    $region82: #{tpu_custom_call.1} parent=1 // pred_check
      _
    $region83: #{tpu_custom_call.1} parent=1 // pred_check_branch
      %129 = sbr.rel (0) target = $region85
    $region84: #{tpu_custom_call.1} parent=1 // pred_region
      %130 = dma.done [#allocation9], 4096
    $region85: #{tpu_custom_call.1} parent=1 // pred_fallthru
      _
    // Predicated region
    $region86: #{tpu_custom_call.1} parent=1 // pred_check
      _
    $region87: #{tpu_custom_call.1} parent=1 // pred_check_branch
      %132 = sbr.rel (0) target = $region89
    $region88: #{tpu_custom_call.1} parent=1 // pred_region
      %133 = dma.done [#allocation9], 2048
    $region89: #{tpu_custom_call.1} parent=1 // pred_fallthru
      _
    // Predicated region
    $region90: #{tpu_custom_call.1} parent=1 // pred_check
      _
    $region91: #{tpu_custom_call.1} parent=1 // pred_check_branch
      %135 = sbr.rel (0) target = $region93
    $region92: #{tpu_custom_call.1} parent=1 // pred_region
      %136 = dma.done [#allocation12], 4096
    $region93: #{tpu_custom_call.1} parent=1 // pred_fallthru
      _
    %v138 = vlaneseq
    %v139 = vshrl.u32 %v138, 7
    %v140 = vadd.s32 %v139, 8
    %vm141 = vcmp.lt.s32.totalorder %v139, 10
    %vm142 = vcmp.lt.s32.totalorder %v140, 10
    %v143 = vld [vmem:[#allocation2] sm:$0xff]
    %v144 = vld [vmem:[#allocation2 + $0x8] sm:$0xff]
    %v145 = vld [vmem:[%s1] sm:$0x1]
    %v146 = vld [vmem:[#allocation5] sm:$0x1]
    %v147 = vld [vmem:[#allocation7] sm:$0xff]
    %v148 = vld [vmem:[#allocation7 + $0x8] sm:$0xff]
    %v149 = vld [vmem:[#allocation7 + $0x10] sm:$0xff]
    %v150 = vld [vmem:[#allocation7 + $0x18] sm:$0xff]
    %v151 = vld [vmem:[#allocation7 + $0x20] sm:$0xff]
    %v152 = vld [vmem:[#allocation7 + $0x28] sm:$0xff]
    %v153 = vld [vmem:[#allocation7 + $0x30] sm:$0xff]
    %v154 = vld [vmem:[#allocation7 + $0x38] sm:$0xff]
    %v155 = vld [vmem:[#allocation7 + $0x40] sm:$0xff]
    %v156 = vld [vmem:[#allocation7 + $0x48] sm:$0xff]
    %v157 = vld [vmem:[#allocation7 + $0x50] sm:$0xff]
    %v158 = vld [vmem:[#allocation7 + $0x58] sm:$0xff]
    %v159 = vld [vmem:[#allocation7 + $0x60] sm:$0xff]
    %v160 = vld [vmem:[#allocation7 + $0x68] sm:$0xff]
    %v161 = vld [vmem:[#allocation7 + $0x70] sm:$0xff]
    %v162 = vld [vmem:[#allocation7 + $0x78] sm:$0xff]
    %v163 = vld [vmem:[%s4] sm:$0x3]
    %v164 = vsel %vm141, 1, 0
    %v165 = vsel %vm142, 1, 0
    %vm166 = vcmp.eq.s32.totalorder %v164, 1
    %vm167 = vcmp.eq.s32.totalorder %v165, 1
    %v168 = vsel %vm166, %v143, 0.0
    %v169 = vsel %vm167, %v144, 0.0
    %v170 = vadd.f32 %v168, %v169
    %v171 = vrot.slane %v170, 4
    %v172 = vadd.f32 %v170, %v171
    %v173 = vrot.slane %v172, 2
    %v174 = vadd.f32 %v172, %v173
    %v175 = vrot.slane %v174, 1
    %v176 = vadd.f32 %v174, %v175
    %v177 = vmul.f32 %v176, 0.1
    %v178 = vmul.f32 %v168, %v168
    %v179 = vmul.f32 %v169, %v169
    %v180 = vadd.f32 %v178, %v179
    %v181 = vrot.slane %v180, 4
    %v182 = vadd.f32 %v180, %v181
    %v183 = vrot.slane %v182, 2
    %v184 = vadd.f32 %v182, %v183
    %v185 = vrot.slane %v184, 1
    %v186 = vadd.f32 %v184, %v185
    %v187 = vmul.f32 %v186, 0.1
    %v188 = vmul.f32 %v177, %v177
    %v189 = vsub.f32 %v187, %v188
    %v190 = vmax.f32 %v189, 0.0
    %v191 = vadd.f32 %v190, 1e-05
    %v192 = vrsqrt.pop %v191
    %v193 = vmul.f32 %v145, %v192
    %v194 = vmul.f32 %v177, %v193
    %v195 = vsub.f32 %v146, %v194
    %v197 = vlaneseq
    %v198 = vshrl.u32 %v197, 7
    %v199 = vsub.s32 0, %v198
    %v200 = vrot.slane %v193, %v199
    %v202 = vmul.f32 %v143, %v200
    %v203 = vmul.f32 %v144, %v200
    %v205 = vlaneseq
    %v206 = vshrl.u32 %v205, 7
    %v207 = vsub.s32 0, %v206
    %v208 = vrot.slane %v195, %v207
    %v210 = vadd.f32 %v202, %v208
    %v211 = vadd.f32 %v203, %v208
    %v212 = vpack.c.bf16 %v211, %v210
    %v214 = vlaneseq
    %v215 = vshrl.u32 %v214, 7
    %v216 = vsub.s32 0, %v215
    %v217 = vrot.slane %v163, %v216
    %v218 = vlaneseq
    %v219 = vshrl.u32 %v218, 7
    %v220 = vsub.s32 1, %v219
    %v221 = vrot.slane %v163, %v220
    %v240 = vunpack.c.l.b16 %v147
    %v241 = vunpack.c.h.b16 %v147
    %v242 = vunpack.c.l.b16 %v148
    %v243 = vunpack.c.h.b16 %v148
    %v244 = vunpack.c.l.b16 %v149
    %v245 = vunpack.c.h.b16 %v149
    %v246 = vunpack.c.l.b16 %v150
    %v247 = vunpack.c.h.b16 %v150
    %v248 = vunpack.c.l.b16 %v151
    %v249 = vunpack.c.h.b16 %v151
    %v250 = vunpack.c.l.b16 %v152
    %v251 = vunpack.c.h.b16 %v152
    %v252 = vunpack.c.l.b16 %v153
    %v253 = vunpack.c.h.b16 %v153
    %v254 = vunpack.c.l.b16 %v154
    %v255 = vunpack.c.h.b16 %v154
    %v256 = vunpack.c.l.b16 %v155
    %v257 = vunpack.c.h.b16 %v155
    %v258 = vunpack.c.l.b16 %v156
    %v259 = vunpack.c.h.b16 %v156
    %v260 = vunpack.c.l.b16 %v157
    %v261 = vunpack.c.h.b16 %v157
    %v262 = vunpack.c.l.b16 %v158
    %v263 = vunpack.c.h.b16 %v158
    %v264 = vunpack.c.l.b16 %v159
    %v265 = vunpack.c.h.b16 %v159
    %v266 = vunpack.c.l.b16 %v160
    %v267 = vunpack.c.h.b16 %v160
    %v268 = vunpack.c.l.b16 %v161
    %v269 = vunpack.c.h.b16 %v161
    %v270 = vunpack.c.l.b16 %v162
    %v271 = vunpack.c.h.b16 %v162
    %v272 = vpack.c.b16 %v242, %v240
    %v273 = vpack.c.b16 %v243, %v241
    %v274 = vpack.c.b16 %v246, %v244
    %v275 = vpack.c.b16 %v247, %v245
    %v276 = vpack.c.b16 %v250, %v248
    %v277 = vpack.c.b16 %v251, %v249
    %v278 = vpack.c.b16 %v254, %v252
    %v279 = vpack.c.b16 %v255, %v253
    %v280 = vpack.c.b16 %v258, %v256
    %v281 = vpack.c.b16 %v259, %v257
    %v282 = vpack.c.b16 %v262, %v260
    %v283 = vpack.c.b16 %v263, %v261
    %v284 = vpack.c.b16 %v266, %v264
    %v285 = vpack.c.b16 %v267, %v265
    %v286 = vpack.c.b16 %v270, %v268
    %v287 = vpack.c.b16 %v271, %v269
    %304 = vmatprep.subr.bf16.mxu0 %v273
    %305 = vmatpush1.bf16.msra.mxu0 %v272
    %306 = vmatprep.subr.bf16.mxu0 %v275
    %307 = vmatpush1.bf16.msra.mxu0 %v274
    %308 = vmatprep.subr.bf16.mxu0 %v277
    %309 = vmatpush1.bf16.msra.mxu0 %v276
    %310 = vmatprep.subr.bf16.mxu0 %v279
    %311 = vmatpush1.bf16.msra.mxu0 %v278
    %312 = vmatprep.subr.bf16.mxu0 %v281
    %313 = vmatpush1.bf16.msra.mxu0 %v280
    %314 = vmatprep.subr.bf16.mxu0 %v283
    %315 = vmatpush1.bf16.msra.mxu0 %v282
    %316 = vmatprep.subr.bf16.mxu0 %v285
    %317 = vmatpush1.bf16.msra.mxu0 %v284
    %318 = vmatprep.subr.bf16.mxu0 %v287
    %319 = vmatpush1.bf16.msra.mxu0 %v286
    %320 = vmatprep.subr.bf16.mxu0 0
    %321 = vmatpush1.bf16.msra.mxu0 0
    %322 = vmatprep.subr.bf16.mxu0 0
    %323 = vmatpush1.bf16.msra.mxu0 0
    %324 = vmatprep.subr.bf16.mxu0 0
    %325 = vmatpush1.bf16.msra.mxu0 0
    %326 = vmatprep.subr.bf16.mxu0 0
    %327 = vmatpush1.bf16.msra.mxu0 0
    %328 = vmatprep.subr.bf16.mxu0 0
    %329 = vmatpush1.bf16.msra.mxu0 0
    %330 = vmatprep.subr.bf16.mxu0 0
    %331 = vmatpush1.bf16.msra.mxu0 0
    %332 = vmatprep.subr.bf16.mxu0 0
    %333 = vmatpush1.bf16.msra.mxu0 0
    %334 = vmatprep.subr.bf16.mxu0 0
    %335 = vmatpush1.bf16.msra.mxu0 0
    %336 = vmatprep.mubr.bf16.mxu0 0
    %337 = vmatmul.mubr.bf16.gmra.mrb[0].mxu0 %v212
    %v338 = vpop.f32.mrb[0].mxu0
    %v339 = vadd.f32 %v217, %v338
    %v340 = vpop.f32.mrb[0].mxu0
    %v341 = vadd.f32 %v221, %v340
    %v342 = vpop.f32.mrb[0].mxu0
    %v343 = vadd.f32 %v217, %v342
    %v344 = vpop.f32.mrb[0].mxu0
    %v345 = vadd.f32 %v221, %v344
    %346 = vdwg.mxu0
    %vm347 = vcmp.ge.f32.partialorder %v339, 0.0
    %vm348 = vcmp.ge.f32.partialorder %v341, 0.0
    %vm349 = vcmp.ge.f32.partialorder %v343, 0.0
    %vm350 = vcmp.ge.f32.partialorder %v345, 0.0
    %v351 = vmul.f32 %v339, 0.01
    %v352 = vmul.f32 %v341, 0.01
    %v353 = vmul.f32 %v343, 0.01
    %v354 = vmul.f32 %v345, 0.01
    %v355 = vsel %vm347, %v339, %v351
    %v356 = vsel %vm348, %v341, %v352
    %v357 = vsel %vm349, %v343, %v353
    %v358 = vsel %vm350, %v345, %v354
    %v359 = vld [vmem:[%s5] sm:$0x3]
    %v360 = vld [vmem:[%s6] sm:$0x3]
    %v361 = vld [vmem:[#allocation8] sm:$0xff]
    %v362 = vld [vmem:[#allocation8 + $0x8] sm:$0xff]
    %v363 = vld [vmem:[#allocation8 + $0x10] sm:$0xff]
    %v364 = vld [vmem:[#allocation8 + $0x18] sm:$0xff]
    %v365 = vld [vmem:[#allocation8 + $0x20] sm:$0xff]
    %v366 = vld [vmem:[#allocation8 + $0x28] sm:$0xff]
    %v367 = vld [vmem:[#allocation8 + $0x30] sm:$0xff]
    %v368 = vld [vmem:[#allocation8 + $0x38] sm:$0xff]
    %v369 = vld [vmem:[#allocation8 + $0x40] sm:$0xff]
    %v370 = vld [vmem:[#allocation8 + $0x48] sm:$0xff]
    %v371 = vld [vmem:[#allocation8 + $0x50] sm:$0xff]
    %v372 = vld [vmem:[#allocation8 + $0x58] sm:$0xff]
    %v373 = vld [vmem:[#allocation8 + $0x60] sm:$0xff]
    %v374 = vld [vmem:[#allocation8 + $0x68] sm:$0xff]
    %v375 = vld [vmem:[#allocation8 + $0x70] sm:$0xff]
    %v376 = vld [vmem:[#allocation8 + $0x78] sm:$0xff]
    %v377 = vld [vmem:[#allocation8 + $0x80] sm:$0xff]
    %v378 = vld [vmem:[#allocation8 + $0x88] sm:$0xff]
    %v379 = vld [vmem:[#allocation8 + $0x90] sm:$0xff]
    %v380 = vld [vmem:[#allocation8 + $0x98] sm:$0xff]
    %v381 = vld [vmem:[#allocation8 + $0xa0] sm:$0xff]
    %v382 = vld [vmem:[#allocation8 + $0xa8] sm:$0xff]
    %v383 = vld [vmem:[#allocation8 + $0xb0] sm:$0xff]
    %v384 = vld [vmem:[#allocation8 + $0xb8] sm:$0xff]
    %v385 = vld [vmem:[#allocation8 + $0xc0] sm:$0xff]
    %v386 = vld [vmem:[#allocation8 + $0xc8] sm:$0xff]
    %v387 = vld [vmem:[#allocation8 + $0xd0] sm:$0xff]
    %v388 = vld [vmem:[#allocation8 + $0xd8] sm:$0xff]
    %v389 = vld [vmem:[#allocation8 + $0xe0] sm:$0xff]
    %v390 = vld [vmem:[#allocation8 + $0xe8] sm:$0xff]
    %v391 = vld [vmem:[#allocation8 + $0xf0] sm:$0xff]
    %v392 = vld [vmem:[#allocation8 + $0xf8] sm:$0xff]
    %v393 = vld [vmem:[%s8] sm:$0x3]
    %v394 = vsel %vm166, %v355, 0.0
    %v395 = vsel %vm166, %v356, 0.0
    %v396 = vsel %vm167, %v357, 0.0
    %v397 = vsel %vm167, %v358, 0.0
    %v398 = vadd.f32 %v394, %v396
    %v399 = vrot.slane %v398, 4
    %v400 = vadd.f32 %v398, %v399
    %v401 = vrot.slane %v400, 2
    %v402 = vadd.f32 %v400, %v401
    %v403 = vrot.slane %v402, 1
    %v404 = vadd.f32 %v402, %v403
    %v405 = vadd.f32 %v395, %v397
    %v406 = vrot.slane %v405, 4
    %v407 = vadd.f32 %v405, %v406
    %v408 = vrot.slane %v407, 2
    %v409 = vadd.f32 %v407, %v408
    %v410 = vrot.slane %v409, 1
    %v411 = vadd.f32 %v409, %v410
    %v412 = vmul.f32 %v404, 0.1
    %v413 = vmul.f32 %v411, 0.1
    %v414 = vmul.f32 %v394, %v394
    %v415 = vmul.f32 %v395, %v395
    %v416 = vmul.f32 %v396, %v396
    %v417 = vmul.f32 %v397, %v397
    %v418 = vadd.f32 %v414, %v416
    %v419 = vrot.slane %v418, 4
    %v420 = vadd.f32 %v418, %v419
    %v421 = vrot.slane %v420, 2
    %v422 = vadd.f32 %v420, %v421
    %v423 = vrot.slane %v422, 1
    %v424 = vadd.f32 %v422, %v423
    %v425 = vadd.f32 %v415, %v417
    %v426 = vrot.slane %v425, 4
    %v427 = vadd.f32 %v425, %v426
    %v428 = vrot.slane %v427, 2
    %v429 = vadd.f32 %v427, %v428
    %v430 = vrot.slane %v429, 1
    %v431 = vadd.f32 %v429, %v430
    %v432 = vmul.f32 %v424, 0.1
    %v433 = vmul.f32 %v431, 0.1
    %v434 = vmul.f32 %v412, %v412
    %v435 = vmul.f32 %v413, %v413
    %v436 = vsub.f32 %v432, %v434
    %v437 = vsub.f32 %v433, %v435
    %v438 = vmax.f32 %v436, 0.0
    %v439 = vmax.f32 %v437, 0.0
    %v440 = vadd.f32 %v438, 1e-05
    %v441 = vadd.f32 %v439, 1e-05
    %v442 = vrsqrt.pop %v440
    %v443 = vrsqrt.pop %v441
    %v446 = vcombine.low %v442, %v443
    %v448 = vunpack.c.l.s4 1966171168
    %v449 = vunpack.c.0.s8 %v448
    %v450 = vlaneseq
    %v451 = vshrl.u32 %v450, 7
    %v452 = vsub.s32 %v449, %v451
    %v453 = vrot.slane %v446, %v452
    %v455 = vunpack.c.l.s4 1966171168
    %v456 = vunpack.c.0.s8 %v455
    %v457 = vlaneseq
    %v458 = vshrl.u32 %v457, 7
    %v459 = vsub.s32 %v456, %v458
    %v460 = vrot.slane %v453, %v459
    %v462 = vmul.f32 %v359, %v460
    %v464 = vlaneseq
    %v465 = vshrl.u32 %v464, 7
    %v466 = vsub.s32 0, %v465
    %v467 = vrot.slane %v462, %v466
    %v468 = vlaneseq
    %v469 = vshrl.u32 %v468, 7
    %v470 = vsub.s32 1, %v469
    %v471 = vrot.slane %v462, %v470
    %v474 = vmul.f32 %v412, %v467
    %v475 = vmul.f32 %v413, %v471
    %v478 = vcombine.low %v474, %v475
    %v480 = vunpack.c.l.s4 1966171168
    %v481 = vunpack.c.0.s8 %v480
    %v482 = vlaneseq
    %v483 = vshrl.u32 %v482, 7
    %v484 = vsub.s32 %v481, %v483
    %v485 = vrot.slane %v478, %v484
    %v487 = vunpack.c.l.s4 1966171168
    %v488 = vunpack.c.0.s8 %v487
    %v489 = vlaneseq
    %v490 = vshrl.u32 %v489, 7
    %v491 = vsub.s32 %v488, %v490
    %v492 = vrot.slane %v485, %v491
    %v494 = vsub.f32 %v360, %v492
    %v495 = vmul.f32 %v355, %v467
    %v496 = vmul.f32 %v356, %v471
    %v497 = vmul.f32 %v357, %v467
    %v498 = vmul.f32 %v358, %v471
    %v500 = vlaneseq
    %v501 = vshrl.u32 %v500, 7
    %v502 = vsub.s32 0, %v501
    %v503 = vrot.slane %v494, %v502
    %v504 = vlaneseq
    %v505 = vshrl.u32 %v504, 7
    %v506 = vsub.s32 1, %v505
    %v507 = vrot.slane %v494, %v506
    %v510 = vadd.f32 %v495, %v503
    %v511 = vadd.f32 %v496, %v507
    %v512 = vadd.f32 %v497, %v503
    %v513 = vadd.f32 %v498, %v507
    %v514 = vpack.c.bf16 %v512, %v510
    %v515 = vpack.c.bf16 %v513, %v511
    %v517 = vlaneseq
    %v518 = vshrl.u32 %v517, 7
    %v519 = vsub.s32 0, %v518
    %v520 = vrot.slane %v393, %v519
    %v521 = vlaneseq
    %v522 = vshrl.u32 %v521, 7
    %v523 = vsub.s32 1, %v522
    %v524 = vrot.slane %v393, %v523
    %v559 = vunpack.c.l.b16 %v361
    %v560 = vunpack.c.h.b16 %v361
    %v561 = vunpack.c.l.b16 %v362
    %v562 = vunpack.c.h.b16 %v362
    %v563 = vunpack.c.l.b16 %v363
    %v564 = vunpack.c.h.b16 %v363
    %v565 = vunpack.c.l.b16 %v364
    %v566 = vunpack.c.h.b16 %v364
    %v567 = vunpack.c.l.b16 %v365
    %v568 = vunpack.c.h.b16 %v365
    %v569 = vunpack.c.l.b16 %v366
    %v570 = vunpack.c.h.b16 %v366
    %v571 = vunpack.c.l.b16 %v367
    %v572 = vunpack.c.h.b16 %v367
    %v573 = vunpack.c.l.b16 %v368
    %v574 = vunpack.c.h.b16 %v368
    %v575 = vunpack.c.l.b16 %v369
    %v576 = vunpack.c.h.b16 %v369
    %v577 = vunpack.c.l.b16 %v370
    %v578 = vunpack.c.h.b16 %v370
    %v579 = vunpack.c.l.b16 %v371
    %v580 = vunpack.c.h.b16 %v371
    %v581 = vunpack.c.l.b16 %v372
    %v582 = vunpack.c.h.b16 %v372
    %v583 = vunpack.c.l.b16 %v373
    %v584 = vunpack.c.h.b16 %v373
    %v585 = vunpack.c.l.b16 %v374
    %v586 = vunpack.c.h.b16 %v374
    %v587 = vunpack.c.l.b16 %v375
    %v588 = vunpack.c.h.b16 %v375
    %v589 = vunpack.c.l.b16 %v376
    %v590 = vunpack.c.h.b16 %v376
    %v591 = vunpack.c.l.b16 %v377
    %v592 = vunpack.c.h.b16 %v377
    %v593 = vunpack.c.l.b16 %v378
    %v594 = vunpack.c.h.b16 %v378
    %v595 = vunpack.c.l.b16 %v379
    %v596 = vunpack.c.h.b16 %v379
    %v597 = vunpack.c.l.b16 %v380
    %v598 = vunpack.c.h.b16 %v380
    %v599 = vunpack.c.l.b16 %v381
    %v600 = vunpack.c.h.b16 %v381
    %v601 = vunpack.c.l.b16 %v382
    %v602 = vunpack.c.h.b16 %v382
    %v603 = vunpack.c.l.b16 %v383
    %v604 = vunpack.c.h.b16 %v383
    %v605 = vunpack.c.l.b16 %v384
    %v606 = vunpack.c.h.b16 %v384
    %v607 = vunpack.c.l.b16 %v385
    %v608 = vunpack.c.h.b16 %v385
    %v609 = vunpack.c.l.b16 %v386
    %v610 = vunpack.c.h.b16 %v386
    %v611 = vunpack.c.l.b16 %v387
    %v612 = vunpack.c.h.b16 %v387
    %v613 = vunpack.c.l.b16 %v388
    %v614 = vunpack.c.h.b16 %v388
    %v615 = vunpack.c.l.b16 %v389
    %v616 = vunpack.c.h.b16 %v389
    %v617 = vunpack.c.l.b16 %v390
    %v618 = vunpack.c.h.b16 %v390
    %v619 = vunpack.c.l.b16 %v391
    %v620 = vunpack.c.h.b16 %v391
    %v621 = vunpack.c.l.b16 %v392
    %v622 = vunpack.c.h.b16 %v392
    %v623 = vpack.c.b16 %v561, %v559
    %v624 = vpack.c.b16 %v562, %v560
    %v625 = vpack.c.b16 %v565, %v563
    %v626 = vpack.c.b16 %v566, %v564
    %v627 = vpack.c.b16 %v569, %v567
    %v628 = vpack.c.b16 %v570, %v568
    %v629 = vpack.c.b16 %v573, %v571
    %v630 = vpack.c.b16 %v574, %v572
    %v631 = vpack.c.b16 %v577, %v575
    %v632 = vpack.c.b16 %v578, %v576
    %v633 = vpack.c.b16 %v581, %v579
    %v634 = vpack.c.b16 %v582, %v580
    %v635 = vpack.c.b16 %v585, %v583
    %v636 = vpack.c.b16 %v586, %v584
    %v637 = vpack.c.b16 %v589, %v587
    %v638 = vpack.c.b16 %v590, %v588
    %v639 = vpack.c.b16 %v593, %v591
    %v640 = vpack.c.b16 %v594, %v592
    %v641 = vpack.c.b16 %v597, %v595
    %v642 = vpack.c.b16 %v598, %v596
    %v643 = vpack.c.b16 %v601, %v599
    %v644 = vpack.c.b16 %v602, %v600
    %v645 = vpack.c.b16 %v605, %v603
    %v646 = vpack.c.b16 %v606, %v604
    %v647 = vpack.c.b16 %v609, %v607
    %v648 = vpack.c.b16 %v610, %v608
    %v649 = vpack.c.b16 %v613, %v611
    %v650 = vpack.c.b16 %v614, %v612
    %v651 = vpack.c.b16 %v617, %v615
    %v652 = vpack.c.b16 %v618, %v616
    %v653 = vpack.c.b16 %v621, %v619
    %v654 = vpack.c.b16 %v622, %v620
    %687 = vmatprep.subr.bf16.mxu0 %v624
    %688 = vmatpush1.bf16.msra.mxu0 %v623
    %689 = vmatprep.subr.bf16.mxu0 %v626
    %690 = vmatpush1.bf16.msra.mxu0 %v625
    %691 = vmatprep.subr.bf16.mxu0 %v628
    %692 = vmatpush1.bf16.msra.mxu0 %v627
    %693 = vmatprep.subr.bf16.mxu0 %v630
    %694 = vmatpush1.bf16.msra.mxu0 %v629
    %695 = vmatprep.subr.bf16.mxu0 %v632
    %696 = vmatpush1.bf16.msra.mxu0 %v631
    %697 = vmatprep.subr.bf16.mxu0 %v634
    %698 = vmatpush1.bf16.msra.mxu0 %v633
    %699 = vmatprep.subr.bf16.mxu0 %v636
    %700 = vmatpush1.bf16.msra.mxu0 %v635
    %701 = vmatprep.subr.bf16.mxu0 %v638
    %702 = vmatpush1.bf16.msra.mxu0 %v637
    %703 = vmatprep.subr.bf16.mxu0 %v640
    %704 = vmatpush1.bf16.msra.mxu0 %v639
    %705 = vmatprep.subr.bf16.mxu0 %v642
    %706 = vmatpush1.bf16.msra.mxu0 %v641
    %707 = vmatprep.subr.bf16.mxu0 %v644
    %708 = vmatpush1.bf16.msra.mxu0 %v643
    %709 = vmatprep.subr.bf16.mxu0 %v646
    %710 = vmatpush1.bf16.msra.mxu0 %v645
    %711 = vmatprep.subr.bf16.mxu0 %v648
    %712 = vmatpush1.bf16.msra.mxu0 %v647
    %713 = vmatprep.subr.bf16.mxu0 %v650
    %714 = vmatpush1.bf16.msra.mxu0 %v649
    %715 = vmatprep.subr.bf16.mxu0 %v652
    %716 = vmatpush1.bf16.msra.mxu0 %v651
    %717 = vmatprep.subr.bf16.mxu0 %v654
    %718 = vmatpush1.bf16.msra.mxu0 %v653
    %719 = vmatprep.mubr.bf16.mxu0 %v515
    %720 = vmatmul.mubr.bf16.gmra.mrb[0].mxu0 %v514
    %v721 = vpop.f32.mrb[0].mxu0
    %v722 = vadd.f32 %v520, %v721
    %v723 = vpop.f32.mrb[0].mxu0
    %v724 = vadd.f32 %v524, %v723
    %v725 = vpop.f32.mrb[0].mxu0
    %v726 = vadd.f32 %v520, %v725
    %v727 = vpop.f32.mrb[0].mxu0
    %v728 = vadd.f32 %v524, %v727
    %729 = vdwg.mxu0
    %vm730 = vcmp.ge.f32.partialorder %v722, 0.0
    %vm731 = vcmp.ge.f32.partialorder %v724, 0.0
    %vm732 = vcmp.ge.f32.partialorder %v726, 0.0
    %vm733 = vcmp.ge.f32.partialorder %v728, 0.0
    %v734 = vmul.f32 %v722, 0.01
    %v735 = vmul.f32 %v724, 0.01
    %v736 = vmul.f32 %v726, 0.01
    %v737 = vmul.f32 %v728, 0.01
    %v738 = vsel %vm730, %v722, %v734
    %v739 = vsel %vm731, %v724, %v735
    %v740 = vsel %vm732, %v726, %v736
    %v741 = vsel %vm733, %v728, %v737
    %v742 = vld [vmem:[%s9] sm:$0x3]
    %v743 = vld [vmem:[%s10] sm:$0x3]
    %v744 = vld [vmem:[#allocation10] sm:$0xf]
    %v745 = vld [vmem:[#allocation10 + $0x4] sm:$0xf]
    %v746 = vld [vmem:[#allocation10 + $0x8] sm:$0xf]
    %v747 = vld [vmem:[#allocation10 + $0xc] sm:$0xf]
    %v748 = vld [vmem:[#allocation10 + $0x10] sm:$0xf]
    %v749 = vld [vmem:[#allocation10 + $0x14] sm:$0xf]
    %v750 = vld [vmem:[#allocation10 + $0x18] sm:$0xf]
    %v751 = vld [vmem:[#allocation10 + $0x1c] sm:$0xf]
    %v752 = vld [vmem:[#allocation10 + $0x20] sm:$0xf]
    %v753 = vld [vmem:[#allocation10 + $0x24] sm:$0xf]
    %v754 = vld [vmem:[#allocation10 + $0x28] sm:$0xf]
    %v755 = vld [vmem:[#allocation10 + $0x2c] sm:$0xf]
    %v756 = vld [vmem:[#allocation10 + $0x30] sm:$0xf]
    %v757 = vld [vmem:[#allocation10 + $0x34] sm:$0xf]
    %v758 = vld [vmem:[#allocation10 + $0x38] sm:$0xf]
    %v759 = vld [vmem:[#allocation10 + $0x3c] sm:$0xf]
    %v760 = vld [vmem:[#allocation10 + $0x40] sm:$0xf]
    %v761 = vld [vmem:[#allocation10 + $0x44] sm:$0xf]
    %v762 = vld [vmem:[#allocation10 + $0x48] sm:$0xf]
    %v763 = vld [vmem:[#allocation10 + $0x4c] sm:$0xf]
    %v764 = vld [vmem:[#allocation10 + $0x50] sm:$0xf]
    %v765 = vld [vmem:[#allocation10 + $0x54] sm:$0xf]
    %v766 = vld [vmem:[#allocation10 + $0x58] sm:$0xf]
    %v767 = vld [vmem:[#allocation10 + $0x5c] sm:$0xf]
    %v768 = vld [vmem:[#allocation10 + $0x60] sm:$0xf]
    %v769 = vld [vmem:[#allocation10 + $0x64] sm:$0xf]
    %v770 = vld [vmem:[#allocation10 + $0x68] sm:$0xf]
    %v771 = vld [vmem:[#allocation10 + $0x6c] sm:$0xf]
    %v772 = vld [vmem:[#allocation10 + $0x70] sm:$0xf]
    %v773 = vld [vmem:[#allocation10 + $0x74] sm:$0xf]
    %v774 = vld [vmem:[#allocation10 + $0x78] sm:$0xf]
    %v775 = vld [vmem:[#allocation10 + $0x7c] sm:$0xf]
    %v776 = vld [vmem:[%s12] sm:$0x1]
    %v777 = vsel %vm166, %v738, 0.0
    %v778 = vsel %vm166, %v739, 0.0
    %v779 = vsel %vm167, %v740, 0.0
    %v780 = vsel %vm167, %v741, 0.0
    %v781 = vadd.f32 %v777, %v779
    %v782 = vrot.slane %v781, 4
    %v783 = vadd.f32 %v781, %v782
    %v784 = vrot.slane %v783, 2
    %v785 = vadd.f32 %v783, %v784
    %v786 = vrot.slane %v785, 1
    %v787 = vadd.f32 %v785, %v786
    %v788 = vadd.f32 %v778, %v780
    %v789 = vrot.slane %v788, 4
    %v790 = vadd.f32 %v788, %v789
    %v791 = vrot.slane %v790, 2
    %v792 = vadd.f32 %v790, %v791
    %v793 = vrot.slane %v792, 1
    %v794 = vadd.f32 %v792, %v793
    %v795 = vmul.f32 %v787, 0.1
    %v796 = vmul.f32 %v794, 0.1
    %v797 = vmul.f32 %v777, %v777
    %v798 = vmul.f32 %v778, %v778
    %v799 = vmul.f32 %v779, %v779
    %v800 = vmul.f32 %v780, %v780
    %v801 = vadd.f32 %v797, %v799
    %v802 = vrot.slane %v801, 4
    %v803 = vadd.f32 %v801, %v802
    %v804 = vrot.slane %v803, 2
    %v805 = vadd.f32 %v803, %v804
    %v806 = vrot.slane %v805, 1
    %v807 = vadd.f32 %v805, %v806
    %v808 = vadd.f32 %v798, %v800
    %v809 = vrot.slane %v808, 4
    %v810 = vadd.f32 %v808, %v809
    %v811 = vrot.slane %v810, 2
    %v812 = vadd.f32 %v810, %v811
    %v813 = vrot.slane %v812, 1
    %v814 = vadd.f32 %v812, %v813
    %v815 = vmul.f32 %v807, 0.1
    %v816 = vmul.f32 %v814, 0.1
    %v817 = vmul.f32 %v795, %v795
    %v818 = vmul.f32 %v796, %v796
    %v819 = vsub.f32 %v815, %v817
    %v820 = vsub.f32 %v816, %v818
    %v821 = vmax.f32 %v819, 0.0
    %v822 = vmax.f32 %v820, 0.0
    %v823 = vadd.f32 %v821, 1e-05
    %v824 = vadd.f32 %v822, 1e-05
    %v825 = vrsqrt.pop %v823
    %v826 = vrsqrt.pop %v824
    %v829 = vcombine.low %v825, %v826
    %v831 = vunpack.c.l.s4 1966171168
    %v832 = vunpack.c.0.s8 %v831
    %v833 = vlaneseq
    %v834 = vshrl.u32 %v833, 7
    %v835 = vsub.s32 %v832, %v834
    %v836 = vrot.slane %v829, %v835
    %v838 = vunpack.c.l.s4 1966171168
    %v839 = vunpack.c.0.s8 %v838
    %v840 = vlaneseq
    %v841 = vshrl.u32 %v840, 7
    %v842 = vsub.s32 %v839, %v841
    %v843 = vrot.slane %v836, %v842
    %v845 = vmul.f32 %v742, %v843
    %v847 = vlaneseq
    %v848 = vshrl.u32 %v847, 7
    %v849 = vsub.s32 0, %v848
    %v850 = vrot.slane %v845, %v849
    %v851 = vlaneseq
    %v852 = vshrl.u32 %v851, 7
    %v853 = vsub.s32 1, %v852
    %v854 = vrot.slane %v845, %v853
    %v857 = vmul.f32 %v795, %v850
    %v858 = vmul.f32 %v796, %v854
    %v861 = vcombine.low %v857, %v858
    %v863 = vunpack.c.l.s4 1966171168
    %v864 = vunpack.c.0.s8 %v863
    %v865 = vlaneseq
    %v866 = vshrl.u32 %v865, 7
    %v867 = vsub.s32 %v864, %v866
    %v868 = vrot.slane %v861, %v867
    %v870 = vunpack.c.l.s4 1966171168
    %v871 = vunpack.c.0.s8 %v870
    %v872 = vlaneseq
    %v873 = vshrl.u32 %v872, 7
    %v874 = vsub.s32 %v871, %v873
    %v875 = vrot.slane %v868, %v874
    %v877 = vsub.f32 %v743, %v875
    %v878 = vmul.f32 %v738, %v850
    %v879 = vmul.f32 %v739, %v854
    %v880 = vmul.f32 %v740, %v850
    %v881 = vmul.f32 %v741, %v854
    %v883 = vlaneseq
    %v884 = vshrl.u32 %v883, 7
    %v885 = vsub.s32 0, %v884
    %v886 = vrot.slane %v877, %v885
    %v887 = vlaneseq
    %v888 = vshrl.u32 %v887, 7
    %v889 = vsub.s32 1, %v888
    %v890 = vrot.slane %v877, %v889
    %v893 = vadd.f32 %v878, %v886
    %v894 = vadd.f32 %v879, %v890
    %v895 = vadd.f32 %v880, %v886
    %v896 = vadd.f32 %v881, %v890
    %v897 = vpack.c.bf16 %v895, %v893
    %v898 = vpack.c.bf16 %v896, %v894
    %v900 = vlaneseq
    %v901 = vshrl.u32 %v900, 7
    %v902 = vsub.s32 0, %v901
    %v903 = vrot.slane %v776, %v902
    %v937 = vunpack.c.l.b16 %v744
    %v938 = vunpack.c.l.b16 %v745
    %v939 = vunpack.c.l.b16 %v746
    %v940 = vunpack.c.l.b16 %v747
    %v941 = vunpack.c.l.b16 %v748
    %v942 = vunpack.c.l.b16 %v749
    %v943 = vunpack.c.l.b16 %v750
    %v944 = vunpack.c.l.b16 %v751
    %v945 = vunpack.c.l.b16 %v752
    %v946 = vunpack.c.l.b16 %v753
    %v947 = vunpack.c.l.b16 %v754
    %v948 = vunpack.c.l.b16 %v755
    %v949 = vunpack.c.l.b16 %v756
    %v950 = vunpack.c.l.b16 %v757
    %v951 = vunpack.c.l.b16 %v758
    %v952 = vunpack.c.l.b16 %v759
    %v953 = vunpack.c.l.b16 %v760
    %v954 = vunpack.c.l.b16 %v761
    %v955 = vunpack.c.l.b16 %v762
    %v956 = vunpack.c.l.b16 %v763
    %v957 = vunpack.c.l.b16 %v764
    %v958 = vunpack.c.l.b16 %v765
    %v959 = vunpack.c.l.b16 %v766
    %v960 = vunpack.c.l.b16 %v767
    %v961 = vunpack.c.l.b16 %v768
    %v962 = vunpack.c.l.b16 %v769
    %v963 = vunpack.c.l.b16 %v770
    %v964 = vunpack.c.l.b16 %v771
    %v965 = vunpack.c.l.b16 %v772
    %v966 = vunpack.c.l.b16 %v773
    %v967 = vunpack.c.l.b16 %v774
    %v968 = vunpack.c.l.b16 %v775
    %v969 = vpack.c.b16 %v938, %v937
    %v970 = vpack.c.b16 %v940, %v939
    %v971 = vpack.c.b16 %v942, %v941
    %v972 = vpack.c.b16 %v944, %v943
    %v973 = vpack.c.b16 %v946, %v945
    %v974 = vpack.c.b16 %v948, %v947
    %v975 = vpack.c.b16 %v950, %v949
    %v976 = vpack.c.b16 %v952, %v951
    %v977 = vpack.c.b16 %v954, %v953
    %v978 = vpack.c.b16 %v956, %v955
    %v979 = vpack.c.b16 %v958, %v957
    %v980 = vpack.c.b16 %v960, %v959
    %v981 = vpack.c.b16 %v962, %v961
    %v982 = vpack.c.b16 %v964, %v963
    %v983 = vpack.c.b16 %v966, %v965
    %v984 = vpack.c.b16 %v968, %v967
    %1001 = vmatprep.subr.bf16.mxu0 0
    %1002 = vmatpush1.bf16.msra.mxu0 %v969
    %1003 = vmatprep.subr.bf16.mxu0 0
    %1004 = vmatpush1.bf16.msra.mxu0 %v970
    %1005 = vmatprep.subr.bf16.mxu0 0
    %1006 = vmatpush1.bf16.msra.mxu0 %v971
    %1007 = vmatprep.subr.bf16.mxu0 0
    %1008 = vmatpush1.bf16.msra.mxu0 %v972
    %1009 = vmatprep.subr.bf16.mxu0 0
    %1010 = vmatpush1.bf16.msra.mxu0 %v973
    %1011 = vmatprep.subr.bf16.mxu0 0
    %1012 = vmatpush1.bf16.msra.mxu0 %v974
    %1013 = vmatprep.subr.bf16.mxu0 0
    %1014 = vmatpush1.bf16.msra.mxu0 %v975
    %1015 = vmatprep.subr.bf16.mxu0 0
    %1016 = vmatpush1.bf16.msra.mxu0 %v976
    %1017 = vmatprep.subr.bf16.mxu0 0
    %1018 = vmatpush1.bf16.msra.mxu0 %v977
    %1019 = vmatprep.subr.bf16.mxu0 0
    %1020 = vmatpush1.bf16.msra.mxu0 %v978
    %1021 = vmatprep.subr.bf16.mxu0 0
    %1022 = vmatpush1.bf16.msra.mxu0 %v979
    %1023 = vmatprep.subr.bf16.mxu0 0
    %1024 = vmatpush1.bf16.msra.mxu0 %v980
    %1025 = vmatprep.subr.bf16.mxu0 0
    %1026 = vmatpush1.bf16.msra.mxu0 %v981
    %1027 = vmatprep.subr.bf16.mxu0 0
    %1028 = vmatpush1.bf16.msra.mxu0 %v982
    %1029 = vmatprep.subr.bf16.mxu0 0
    %1030 = vmatpush1.bf16.msra.mxu0 %v983
    %1031 = vmatprep.subr.bf16.mxu0 0
    %1032 = vmatpush1.bf16.msra.mxu0 %v984
    %1033 = vmatprep.mubr.bf16.mxu0 %v898
    %1034 = vmatmul.mubr.bf16.gmra.mrb[0].mxu0 %v897
    %v1035 = vpop.f32.mrb[0].mxu0
    %v1036 = vadd.f32 %v903, %v1035
    %v1037 = vpop.f32.mrb[0].mxu0
    %v1038 = vpop.f32.mrb[0].mxu0
    %v1039 = vadd.f32 %v903, %v1038
    %v1040 = vpop.f32.mrb[0].mxu0
    %1041 = vdwg.mxu0
    %vm1042 = vcmp.ge.f32.partialorder %v1036, 0.0
    %vm1043 = vcmp.ge.f32.partialorder %v1039, 0.0
    %v1044 = vmul.f32 %v1036, 0.01
    %v1045 = vmul.f32 %v1039, 0.01
    %v1046 = vsel %vm1042, %v1036, %v1044
    %v1047 = vsel %vm1043, %v1039, %v1045
    %v1048 = vld [vmem:[%s13] sm:$0x1]
    %v1049 = vld [vmem:[%s14] sm:$0x1]
    %v1050 = vld [vmem:[#allocation11] sm:$0xff]
    %v1051 = vld [vmem:[#allocation11 + $0x8] sm:$0xff]
    %v1052 = vld [vmem:[#allocation11 + $0x10] sm:$0xff]
    %v1053 = vld [vmem:[#allocation11 + $0x18] sm:$0xff]
    %v1054 = vld [vmem:[#allocation11 + $0x20] sm:$0xff]
    %v1055 = vld [vmem:[#allocation11 + $0x28] sm:$0xff]
    %v1056 = vld [vmem:[#allocation11 + $0x30] sm:$0xff]
    %v1057 = vld [vmem:[#allocation11 + $0x38] sm:$0xff]
    %v1058 = vld [vmem:[#allocation11 + $0x40] sm:$0xff]
    %v1059 = vld [vmem:[#allocation11 + $0x48] sm:$0xff]
    %v1060 = vld [vmem:[#allocation11 + $0x50] sm:$0xff]
    %v1061 = vld [vmem:[#allocation11 + $0x58] sm:$0xff]
    %v1062 = vld [vmem:[#allocation11 + $0x60] sm:$0xff]
    %v1063 = vld [vmem:[#allocation11 + $0x68] sm:$0xff]
    %v1064 = vld [vmem:[#allocation11 + $0x70] sm:$0xff]
    %v1065 = vld [vmem:[#allocation11 + $0x78] sm:$0xff]
    %v1066 = vld [vmem:[#allocation11 + $0x80] sm:$0xff]
    %v1067 = vld [vmem:[#allocation11 + $0x88] sm:$0xff]
    %v1068 = vld [vmem:[#allocation11 + $0x90] sm:$0xff]
    %v1069 = vld [vmem:[#allocation11 + $0x98] sm:$0xff]
    %v1070 = vld [vmem:[#allocation11 + $0xa0] sm:$0xff]
    %v1071 = vld [vmem:[#allocation11 + $0xa8] sm:$0xff]
    %v1072 = vld [vmem:[#allocation11 + $0xb0] sm:$0xff]
    %v1073 = vld [vmem:[#allocation11 + $0xb8] sm:$0xff]
    %v1074 = vld [vmem:[#allocation11 + $0xc0] sm:$0xff]
    %v1075 = vld [vmem:[#allocation11 + $0xc8] sm:$0xff]
    %v1076 = vld [vmem:[#allocation11 + $0xd0] sm:$0xff]
    %v1077 = vld [vmem:[#allocation11 + $0xd8] sm:$0xff]
    %v1078 = vld [vmem:[#allocation11 + $0xe0] sm:$0xff]
    %v1079 = vld [vmem:[#allocation11 + $0xe8] sm:$0xff]
    %v1080 = vld [vmem:[#allocation11 + $0xf0] sm:$0xff]
    %v1081 = vld [vmem:[#allocation11 + $0xf8] sm:$0xff]
    %v1082 = vld [vmem:[%s16] sm:$0xf]
    %v1083 = vsel %vm166, %v1046, 0.0
    %v1084 = vsel %vm167, %v1047, 0.0
    %v1085 = vadd.f32 %v1083, %v1084
    %v1086 = vrot.slane %v1085, 4
    %v1087 = vadd.f32 %v1085, %v1086
    %v1088 = vrot.slane %v1087, 2
    %v1089 = vadd.f32 %v1087, %v1088
    %v1090 = vrot.slane %v1089, 1
    %v1091 = vadd.f32 %v1089, %v1090
    %v1092 = vmul.f32 %v1091, 0.1
    %v1093 = vmul.f32 %v1083, %v1083
    %v1094 = vmul.f32 %v1084, %v1084
    %v1095 = vadd.f32 %v1093, %v1094
    %v1096 = vrot.slane %v1095, 4
    %v1097 = vadd.f32 %v1095, %v1096
    %v1098 = vrot.slane %v1097, 2
    %v1099 = vadd.f32 %v1097, %v1098
    %v1100 = vrot.slane %v1099, 1
    %v1101 = vadd.f32 %v1099, %v1100
    %v1102 = vmul.f32 %v1101, 0.1
    %v1103 = vmul.f32 %v1092, %v1092
    %v1104 = vsub.f32 %v1102, %v1103
    %v1105 = vmax.f32 %v1104, 0.0
    %v1106 = vadd.f32 %v1105, 1e-05
    %v1107 = vrsqrt.pop %v1106
    %v1108 = vmul.f32 %v1048, %v1107
    %v1109 = vmul.f32 %v1092, %v1108
    %v1110 = vsub.f32 %v1049, %v1109
    %v1112 = vlaneseq
    %v1113 = vshrl.u32 %v1112, 7
    %v1114 = vsub.s32 0, %v1113
    %v1115 = vrot.slane %v1108, %v1114
    %v1117 = vmul.f32 %v1046, %v1115
    %v1118 = vmul.f32 %v1047, %v1115
    %v1120 = vlaneseq
    %v1121 = vshrl.u32 %v1120, 7
    %v1122 = vsub.s32 0, %v1121
    %v1123 = vrot.slane %v1110, %v1122
    %v1125 = vadd.f32 %v1117, %v1123
    %v1126 = vadd.f32 %v1118, %v1123
    %v1127 = vpack.c.bf16 %v1126, %v1125
    %v1129 = vlaneseq
    %v1130 = vshrl.u32 %v1129, 7
    %v1131 = vsub.s32 0, %v1130
    %v1132 = vrot.slane %v1082, %v1131
    %v1133 = vlaneseq
    %v1134 = vshrl.u32 %v1133, 7
    %v1135 = vsub.s32 1, %v1134
    %v1136 = vrot.slane %v1082, %v1135
    %v1137 = vlaneseq
    %v1138 = vshrl.u32 %v1137, 7
    %v1139 = vsub.s32 2, %v1138
    %v1140 = vrot.slane %v1082, %v1139
    %v1141 = vlaneseq
    %v1142 = vshrl.u32 %v1141, 7
    %v1143 = vsub.s32 3, %v1142
    %v1144 = vrot.slane %v1082, %v1143
    %v1181 = vunpack.c.l.b16 %v1050
    %v1182 = vunpack.c.h.b16 %v1050
    %v1183 = vunpack.c.l.b16 %v1051
    %v1184 = vunpack.c.h.b16 %v1051
    %v1185 = vunpack.c.l.b16 %v1052
    %v1186 = vunpack.c.h.b16 %v1052
    %v1187 = vunpack.c.l.b16 %v1053
    %v1188 = vunpack.c.h.b16 %v1053
    %v1189 = vunpack.c.l.b16 %v1054
    %v1190 = vunpack.c.h.b16 %v1054
    %v1191 = vunpack.c.l.b16 %v1055
    %v1192 = vunpack.c.h.b16 %v1055
    %v1193 = vunpack.c.l.b16 %v1056
    %v1194 = vunpack.c.h.b16 %v1056
    %v1195 = vunpack.c.l.b16 %v1057
    %v1196 = vunpack.c.h.b16 %v1057
    %v1197 = vunpack.c.l.b16 %v1058
    %v1198 = vunpack.c.h.b16 %v1058
    %v1199 = vunpack.c.l.b16 %v1059
    %v1200 = vunpack.c.h.b16 %v1059
    %v1201 = vunpack.c.l.b16 %v1060
    %v1202 = vunpack.c.h.b16 %v1060
    %v1203 = vunpack.c.l.b16 %v1061
    %v1204 = vunpack.c.h.b16 %v1061
    %v1205 = vunpack.c.l.b16 %v1062
    %v1206 = vunpack.c.h.b16 %v1062
    %v1207 = vunpack.c.l.b16 %v1063
    %v1208 = vunpack.c.h.b16 %v1063
    %v1209 = vunpack.c.l.b16 %v1064
    %v1210 = vunpack.c.h.b16 %v1064
    %v1211 = vunpack.c.l.b16 %v1065
    %v1212 = vunpack.c.h.b16 %v1065
    %v1213 = vunpack.c.l.b16 %v1066
    %v1214 = vunpack.c.h.b16 %v1066
    %v1215 = vunpack.c.l.b16 %v1067
    %v1216 = vunpack.c.h.b16 %v1067
    %v1217 = vunpack.c.l.b16 %v1068
    %v1218 = vunpack.c.h.b16 %v1068
    %v1219 = vunpack.c.l.b16 %v1069
    %v1220 = vunpack.c.h.b16 %v1069
    %v1221 = vunpack.c.l.b16 %v1070
    %v1222 = vunpack.c.h.b16 %v1070
    %v1223 = vunpack.c.l.b16 %v1071
    %v1224 = vunpack.c.h.b16 %v1071
    %v1225 = vunpack.c.l.b16 %v1072
    %v1226 = vunpack.c.h.b16 %v1072
    %v1227 = vunpack.c.l.b16 %v1073
    %v1228 = vunpack.c.h.b16 %v1073
    %v1229 = vunpack.c.l.b16 %v1074
    %v1230 = vunpack.c.h.b16 %v1074
    %v1231 = vunpack.c.l.b16 %v1075
    %v1232 = vunpack.c.h.b16 %v1075
    %v1233 = vunpack.c.l.b16 %v1076
    %v1234 = vunpack.c.h.b16 %v1076
    %v1235 = vunpack.c.l.b16 %v1077
    %v1236 = vunpack.c.h.b16 %v1077
    %v1237 = vunpack.c.l.b16 %v1078
    %v1238 = vunpack.c.h.b16 %v1078
    %v1239 = vunpack.c.l.b16 %v1079
    %v1240 = vunpack.c.h.b16 %v1079
    %v1241 = vunpack.c.l.b16 %v1080
    %v1242 = vunpack.c.h.b16 %v1080
    %v1243 = vunpack.c.l.b16 %v1081
    %v1244 = vunpack.c.h.b16 %v1081
    %v1245 = vpack.c.b16 %v1185, %v1181
    %v1246 = vpack.c.b16 %v1186, %v1182
    %v1247 = vpack.c.b16 %v1187, %v1183
    %v1248 = vpack.c.b16 %v1188, %v1184
    %v1249 = vpack.c.b16 %v1193, %v1189
    %v1250 = vpack.c.b16 %v1194, %v1190
    %v1251 = vpack.c.b16 %v1195, %v1191
    %v1252 = vpack.c.b16 %v1196, %v1192
    %v1253 = vpack.c.b16 %v1201, %v1197
    %v1254 = vpack.c.b16 %v1202, %v1198
    %v1255 = vpack.c.b16 %v1203, %v1199
    %v1256 = vpack.c.b16 %v1204, %v1200
    %v1257 = vpack.c.b16 %v1209, %v1205
    %v1258 = vpack.c.b16 %v1210, %v1206
    %v1259 = vpack.c.b16 %v1211, %v1207
    %v1260 = vpack.c.b16 %v1212, %v1208
    %v1261 = vpack.c.b16 %v1217, %v1213
    %v1262 = vpack.c.b16 %v1218, %v1214
    %v1263 = vpack.c.b16 %v1219, %v1215
    %v1264 = vpack.c.b16 %v1220, %v1216
    %v1265 = vpack.c.b16 %v1225, %v1221
    %v1266 = vpack.c.b16 %v1226, %v1222
    %v1267 = vpack.c.b16 %v1227, %v1223
    %v1268 = vpack.c.b16 %v1228, %v1224
    %v1269 = vpack.c.b16 %v1233, %v1229
    %v1270 = vpack.c.b16 %v1234, %v1230
    %v1271 = vpack.c.b16 %v1235, %v1231
    %v1272 = vpack.c.b16 %v1236, %v1232
    %v1273 = vpack.c.b16 %v1241, %v1237
    %v1274 = vpack.c.b16 %v1242, %v1238
    %v1275 = vpack.c.b16 %v1243, %v1239
    %v1276 = vpack.c.b16 %v1244, %v1240
    %1309 = vmatprep.subr.bf16.mxu0 %v1246
    %1310 = vmatpush1.bf16.msra.mxu0 %v1245
    %1311 = vmatprep.subr.bf16.mxu0 %v1250
    %1312 = vmatpush1.bf16.msra.mxu0 %v1249
    %1313 = vmatprep.subr.bf16.mxu0 %v1254
    %1314 = vmatpush1.bf16.msra.mxu0 %v1253
    %1315 = vmatprep.subr.bf16.mxu0 %v1258
    %1316 = vmatpush1.bf16.msra.mxu0 %v1257
    %1317 = vmatprep.subr.bf16.mxu0 %v1262
    %1318 = vmatpush1.bf16.msra.mxu0 %v1261
    %1319 = vmatprep.subr.bf16.mxu0 %v1266
    %1320 = vmatpush1.bf16.msra.mxu0 %v1265
    %1321 = vmatprep.subr.bf16.mxu0 %v1270
    %1322 = vmatpush1.bf16.msra.mxu0 %v1269
    %1323 = vmatprep.subr.bf16.mxu0 %v1274
    %1324 = vmatpush1.bf16.msra.mxu0 %v1273
    %1325 = vmatprep.subr.bf16.mxu0 0
    %1326 = vmatpush1.bf16.msra.mxu0 0
    %1327 = vmatprep.subr.bf16.mxu0 0
    %1328 = vmatpush1.bf16.msra.mxu0 0
    %1329 = vmatprep.subr.bf16.mxu0 0
    %1330 = vmatpush1.bf16.msra.mxu0 0
    %1331 = vmatprep.subr.bf16.mxu0 0
    %1332 = vmatpush1.bf16.msra.mxu0 0
    %1333 = vmatprep.subr.bf16.mxu0 0
    %1334 = vmatpush1.bf16.msra.mxu0 0
    %1335 = vmatprep.subr.bf16.mxu0 0
    %1336 = vmatpush1.bf16.msra.mxu0 0
    %1337 = vmatprep.subr.bf16.mxu0 0
    %1338 = vmatpush1.bf16.msra.mxu0 0
    %1339 = vmatprep.subr.bf16.mxu0 0
    %1340 = vmatpush1.bf16.msra.mxu0 0
    %1341 = vmatprep.mubr.bf16.mxu0 0
    %1342 = vmatmul.mubr.bf16.gmra.mrb[0].mxu0 %v1127
    %v1343 = vpop.f32.mrb[0].mxu0
    %v1344 = vadd.f32 %v1132, %v1343
    %v1345 = vpop.f32.mrb[0].mxu0
    %v1346 = vadd.f32 %v1136, %v1345
    %v1347 = vpop.f32.mrb[0].mxu0
    %v1348 = vadd.f32 %v1132, %v1347
    %v1349 = vpop.f32.mrb[0].mxu0
    %v1350 = vadd.f32 %v1136, %v1349
    %1351 = vdwg.mxu0
    %1352 = vmatprep.subr.bf16.mxu0 %v1248
    %1353 = vmatpush1.bf16.msra.mxu0 %v1247
    %1354 = vmatprep.subr.bf16.mxu0 %v1252
    %1355 = vmatpush1.bf16.msra.mxu0 %v1251
    %1356 = vmatprep.subr.bf16.mxu0 %v1256
    %1357 = vmatpush1.bf16.msra.mxu0 %v1255
    %1358 = vmatprep.subr.bf16.mxu0 %v1260
    %1359 = vmatpush1.bf16.msra.mxu0 %v1259
    %1360 = vmatprep.subr.bf16.mxu0 %v1264
    %1361 = vmatpush1.bf16.msra.mxu0 %v1263
    %1362 = vmatprep.subr.bf16.mxu0 %v1268
    %1363 = vmatpush1.bf16.msra.mxu0 %v1267
    %1364 = vmatprep.subr.bf16.mxu0 %v1272
    %1365 = vmatpush1.bf16.msra.mxu0 %v1271
    %1366 = vmatprep.subr.bf16.mxu0 %v1276
    %1367 = vmatpush1.bf16.msra.mxu0 %v1275
    %1368 = vmatprep.subr.bf16.mxu0 0
    %1369 = vmatpush1.bf16.msra.mxu0 0
    %1370 = vmatprep.subr.bf16.mxu0 0
    %1371 = vmatpush1.bf16.msra.mxu0 0
    %1372 = vmatprep.subr.bf16.mxu0 0
    %1373 = vmatpush1.bf16.msra.mxu0 0
    %1374 = vmatprep.subr.bf16.mxu0 0
    %1375 = vmatpush1.bf16.msra.mxu0 0
    %1376 = vmatprep.subr.bf16.mxu0 0
    %1377 = vmatpush1.bf16.msra.mxu0 0
    %1378 = vmatprep.subr.bf16.mxu0 0
    %1379 = vmatpush1.bf16.msra.mxu0 0
    %1380 = vmatprep.subr.bf16.mxu0 0
    %1381 = vmatpush1.bf16.msra.mxu0 0
    %1382 = vmatprep.subr.bf16.mxu0 0
    %1383 = vmatpush1.bf16.msra.mxu0 0
    %1384 = vmatprep.mubr.bf16.mxu0 0
    %1385 = vmatmul.mubr.bf16.gmra.mrb[0].mxu0 %v1127
    %v1386 = vpop.f32.mrb[0].mxu0
    %v1387 = vadd.f32 %v1140, %v1386
    %v1388 = vpop.f32.mrb[0].mxu0
    %v1389 = vadd.f32 %v1144, %v1388
    %v1390 = vpop.f32.mrb[0].mxu0
    %v1391 = vadd.f32 %v1140, %v1390
    %v1392 = vpop.f32.mrb[0].mxu0
    %v1393 = vadd.f32 %v1144, %v1392
    %1394 = vdwg.mxu0
    %1395 = vst [vmem:[#allocation13] sm:$0xff] %v1344
    %1396 = vst [vmem:[#allocation13 + $0x8] sm:$0xff] %v1346
    %1397 = vst [vmem:[#allocation13 + $0x10] sm:$0xff] %v1387
    %1398 = vst [vmem:[#allocation13 + $0x18] sm:$0xff] %v1389
    %1399 = vst [vmem:[#allocation13 + $0x20] sm:$0xff] %v1348
    %1400 = vst [vmem:[#allocation13 + $0x28] sm:$0xff] %v1350
    %1401 = vst [vmem:[#allocation13 + $0x30] sm:$0xff] %v1391
    %1402 = vst [vmem:[#allocation13 + $0x38] sm:$0xff] %v1393
    // Predicated region
    $region94: #{tpu_custom_call.1} parent=1 // pred_check
      _
    $region95: #{tpu_custom_call.1} parent=1 // pred_check_branch
      %1404 = sbr.rel (0) target = $region97
    $region96: #{tpu_custom_call.1} parent=1 // pred_region
      %s1406 = ssub.s32 1024, 1024
      %1407 = vsyncadd [#allocation4], %s1406
      %s1408 = sshll.u32 [#allocation13], 4
      %s1409 = int_to_ptr.vmem [resolvable:$true] %s1408
      %1414 = dma.vmem_to_hbm [thread:$0]  %s1409, 1024, %s17, [#allocation4], 512, 512, 32
    $region97: #{tpu_custom_call.1} parent=1 // pred_fallthru
      _
    // Predicated region
    $region98: #{tpu_custom_call.1} parent=1 // pred_check
      _
    $region99: #{tpu_custom_call.1} parent=1 // pred_check_branch
      %1416 = sbr.rel (0) target = $region101
    $region100: #{tpu_custom_call.1} parent=1 // pred_region
      %1417 = dma.done [#allocation4], 1024
    $region101: #{tpu_custom_call.1} parent=1 // pred_fallthru
      _
    %1418 = vsyncpa [#allocation3], 1
    %1419 = vsyncpa [#allocation6], 1
    %1420 = vsyncpa [#allocation9], 1
    %1421 = vsyncpa [#allocation12], 1
    %1422 = vsyncpa [#allocation4], 1

</llo_original>
